<compile_context>
chip_gen: v7x
topology: tpu7x:2x2x1
jax: 0.10.0
libtpu: 0.0.40
codegen_flags: <defaults>
</compile_context>

<pallas_src>
import functools

import jax
import jax.numpy as jnp
from jax.experimental import pallas as pl
from jax.experimental.pallas import tpu as pltpu

# SMARTLoss defaults
NUM_STEPS = 1
STEP_SIZE = 1e-3
EPSILON = 1e-6
NOISE_VAR = 1e-5


def _round_up(x, m):
    return (x + m - 1) // m * m


def smart_loss_kernel(embed_ref, noise_ref, state_ref, mask_ref,
                      wf_ref, wb_ref, wt_ref, b_ref, out_ref, *,
                      num_steps, step_size, epsilon, noise_var, inv_n_out):
    mask = mask_ref[...].astype(jnp.float32)                 # (TM, 1)
    # mask multiply hoisted out of eval_fn (eval_fn is called num_steps+1 times)
    embed_m = embed_ref[...].astype(jnp.float32) * mask      # (TM, H)
    state = state_ref[...].astype(jnp.float32)               # (TM, Cp)
    w_f32 = wf_ref[...]                                      # (H, Cp)  resident
    w_bf16 = wb_ref[...]                                     # (H, Cp)  resident, pre-cast
    wt_bf16 = wt_ref[...]                                    # (Cp, H)  resident, pre-transposed
    b = b_ref[...].astype(jnp.float32)                       # (1, Cp)

    # Loop-invariant part of eval_fn (linearity of the head): fp32 MXU once per
    # tile, so (base - state) keeps full precision even when the perturbation
    # is only ~noise_var below fp32 of the embeddings.
    # TODO(synk): on v5e, if the f32 matmul lowers to >=4 MXU passes, replace
    # with a bf16x3 split of embed_m / W.
    base_minus_state = (
        jnp.dot(embed_m, w_f32, preferred_element_type=jnp.float32) + b) - state

    # noise = randn_like(embed) * noise_var, masked ONCE up front.  The masked
    # gradient keeps it masked, so eval_fn no longer needs a per-call `* mask`.
    noise = noise_ref[...].astype(jnp.float32) * (noise_var * mask)   # (TM, H)

    def diff_of(nz):
        # eval_fn(embed + nz, mask) - state ; noise-dependent part on bf16 MXU.
        delta = jnp.dot(nz.astype(jnp.bfloat16), w_bf16,
                        preferred_element_type=jnp.float32)
        return base_minus_state + delta

    # The `for i in count()` loop of SMARTLoss, unrolled statically.
    # NOTE: num_steps defaults to 1; if ever raised above ~2 convert to
    # lax.fori_loop(..., unroll=True) to bound vreg live ranges.
    for _ in range(num_steps):
        diff = diff_of(noise)
        # analytic torch.autograd.grad(mse_mean, noise); N is the GLOBAL B*S*C.
        # Only valid for MSE-mean loss with this linear eval_fn.
        grad = (2.0 * inv_n_out) * jnp.dot(
            diff.astype(jnp.bfloat16), wt_bf16,
            preferred_element_type=jnp.float32) * mask
        step = noise + step_size * grad
        step_norm = jnp.max(jnp.abs(step), axis=-1, keepdims=True)   # inf_norm
        noise = step / (step_norm + epsilon)

    # i == num_steps  ->  loss_last_fn(eval_fn(embed + noise), state)
    diff_last = diff_of(noise)
    # lane-dense per-tile partial sum of squared error (scalar mean done outside)
    out_ref[...] = jnp.sum(diff_last * diff_last, axis=0)[None, None, :]


def smart_loss(embed, state, attention_mask, w, b, noise, *, tm=512,
               num_steps=NUM_STEPS, step_size=STEP_SIZE,
               epsilon=EPSILON, noise_var=NOISE_VAR):
    B, S, H = embed.shape
    C = state.shape[-1]
    BS = B * S
    n_out = BS * C                         # TRUE element count of the MSE mean

    Cp = _round_up(C, 128)                 # lane-dense classifier width

    # --- row-tile selection ------------------------------------------------
    # multiple of 32 (bf16 vregs pack 16 sublanes; 32 keeps every operand clean)
    tm = max(32, _round_up(min(tm, BS), 32))
    # keep >= 2 tiles when there is enough work (v7x megacore: both TCs busy)
    if _round_up(BS, tm) // tm < 2 and BS >= 64:
        tm = max(32, _round_up(-(-BS // 2), 32))

    # --- generation-aware VMEM budget --------------------------------------
    try:
        phys_vmem = int(getattr(pltpu.get_tpu_info(), "vmem_capacity_bytes",
                                64 * 1024 * 1024))
    except Exception:
        phys_vmem = 64 * 1024 * 1024       # v7x floor: re-derive, don't inherit
    vmem_budget = int(phys_vmem * 0.75)

    def _vmem_estimate(tm_):
        # double-buffered streamed tiles: embed f32, noise bf16, state f32, mask f32
        stream = 2 * tm_ * (H * 4 + H * 2 + Cp * 4 + 4)
        # residents (counted double-buffered to be conservative): W f32, W bf16, W^T bf16, b
        resident = 2 * (H * Cp * 4 + H * Cp * 2 + Cp * H * 2 + Cp * 4)
        # live f32 intermediates inside the body
        interm = 6 * tm_ * H * 4 + 4 * tm_ * Cp * 4
        return stream + resident + interm + 2 * Cp * 4

    while _vmem_estimate(tm) > vmem_budget and tm > 32:
        tm = max(32, _round_up(tm // 2, 32))

    vmem_limit = int(min(phys_vmem - (4 << 20),
                         max(_vmem_estimate(tm) + (8 << 20), 32 << 20)))
    vmem_limit = max(vmem_limit, 16 << 20)

    BSp = _round_up(BS, tm)
    num_tiles = BSp // tm

    # --- host-side reshapes / dtype prep ------------------------------------
    embed2 = embed.reshape(BS, H).astype(jnp.float32)          # keep f32 (cancellation)
    noise2 = noise.reshape(BS, H).astype(jnp.bfloat16)         # N(0,1): bf16 is plenty
    state2 = state.reshape(BS, C).astype(jnp.float32)
    mask2 = attention_mask.reshape(BS, 1).astype(jnp.float32)
    b2 = b.reshape(1, C).astype(jnp.float32)
    w_f = w.astype(jnp.float32)

    # Pad classifier dim to 128 lanes with zeros: padded columns give diff == 0
    # (W, b, state all zero there), so they add nothing to the sum.
    if Cp != C:
        state2 = jnp.pad(state2, ((0, 0), (0, Cp - C)))
        w_f = jnp.pad(w_f, ((0, 0), (0, Cp - C)))
        b_p = jnp.pad(b2, ((0, 0), (0, Cp - C)))
    else:
        b_p = b2

    # Pad rows to a multiple of the tile.  Padded rows get mask == 0, so
    # eval_fn == b there; padding `state` rows with b makes their diff exactly
    # 0 and the inf-norm normalization stays finite (0 / eps).
    if BSp != BS:
        pad = BSp - BS
        embed2 = jnp.pad(embed2, ((0, pad), (0, 0)))
        noise2 = jnp.pad(noise2, ((0, pad), (0, 0)))
        mask2 = jnp.pad(mask2, ((0, pad), (0, 0)))
        state2 = jnp.concatenate(
            [state2, jnp.broadcast_to(b_p, (pad, Cp))], axis=0)

    # Pre-cast / pre-transpose W once in the wrapper (no per-tile VPU cast and
    # no in-kernel XLU transpose).
    w_bf = w_f.astype(jnp.bfloat16)
    wt_bf = w_f.T.astype(jnp.bfloat16)

    kernel = functools.partial(
        smart_loss_kernel,
        num_steps=num_steps, step_size=step_size, epsilon=epsilon,
        noise_var=noise_var, inv_n_out=1.0 / n_out)

    def _call(single_buffer_residents):
        res_kw = ({"pipeline_mode": pl.Buffered(1)}
                  if single_buffer_residents else {})
        grid_spec = pltpu.PrefetchScalarGridSpec(
            num_scalar_prefetch=0,
            grid=(num_tiles,),
            in_specs=[
                pl.BlockSpec((tm, H), lambda i: (i, 0)),              # embed  (streamed, f32)
                pl.BlockSpec((tm, H), lambda i: (i, 0)),              # noise  (streamed, bf16)
                pl.BlockSpec((tm, Cp), lambda i: (i, 0)),             # state  (streamed, f32)
                pl.BlockSpec((tm, 1), lambda i: (i, 0)),              # mask   (streamed)
                pl.BlockSpec((H, Cp), lambda i: (0, 0), **res_kw),    # W f32  (resident)
                pl.BlockSpec((H, Cp), lambda i: (0, 0), **res_kw),    # W bf16 (resident)
                pl.BlockSpec((Cp, H), lambda i: (0, 0), **res_kw),    # W^T    (resident)
                pl.BlockSpec((1, Cp), lambda i: (0, 0), **res_kw),    # b      (resident)
            ],
            out_specs=pl.BlockSpec((1, 1, Cp), lambda i: (i, 0, 0)),
        )
        return pl.pallas_call(
            kernel,
            out_shape=jax.ShapeDtypeStruct((num_tiles, 1, Cp), jnp.float32),
            grid_spec=grid_spec,
            compiler_params=pltpu.CompilerParams(
                dimension_semantics=("parallel",),      # v7x: shard tiles on 2 TCs
                vmem_limit_bytes=vmem_limit),
        )(embed2, noise2, state2, mask2, w_f, w_bf, wt_bf, b_p)

    try:
        partial_sums = _call(True)
    except Exception:
        # pipeline_mode=pl.Buffered(1) unsupported on this jax build: residents
        # fall back to default double buffering (correctness unaffected).
        partial_sums = _call(False)

    return jnp.sum(partial_sums) / n_out


def smart_loss_ref(embed, state, attention_mask, w, b, noise):
    """Pure-JAX fp32 reference mirroring the PyTorch SMARTLoss.forward semantics."""
    maskf = attention_mask[..., None].astype(jnp.float32)

    def eval_fn(e):
        return jnp.einsum("bsh,hc->bsc", e * maskf, w) + b

    def loss_fn(nz):
        d = eval_fn(embed + nz) - state
        return jnp.mean(d * d)

    nz = noise.astype(jnp.float32) * NOISE_VAR
    for _ in range(NUM_STEPS):
        g = jax.grad(loss_fn)(nz)                    # torch.autograd.grad(loss, noise)
        step = nz + STEP_SIZE * g
        step_norm = jnp.max(jnp.abs(step), axis=-1, keepdims=True)
        nz = step / (step_norm + EPSILON)
    return loss_fn(nz)


if __name__ == "__main__":
    B, S, H, C = 2, 40, 32, 8
    key = jax.random.PRNGKey(0)
    k_embed, k_w, k_b, k_noise, k_mask = jax.random.split(key, 5)

    embed = jax.random.normal(k_embed, (B, S, H), dtype=jnp.float32)
    attention_mask = (jax.random.uniform(k_mask, (B, S)) > 0.2).astype(jnp.float32)
    # deterministic "head" parameters (eval_fn weights)
    w = jax.random.normal(k_w, (H, C), dtype=jnp.float32) * 0.1
    b = jax.random.normal(k_b, (C,), dtype=jnp.float32) * 0.1
    # clean state = eval_fn(embed, mask)
    state = jnp.einsum("bsh,hc->bsc", embed * attention_mask[..., None], w) + b
    # noise ~ randn_like(embed)  (scaled by noise_var inside the kernel)
    # TODO(synk): torch.randn_like RNG is sampled host-side with jax.random.
    noise = jax.random.normal(k_noise, (B, S, H), dtype=jnp.float32)

    # tm=32 -> 3 row tiles (80 rows padded to 96): exercises the parallel grid,
    # the row-padding path, and the partial-sum reduction.
    loss = smart_loss(embed, state, attention_mask, w, b, noise, tm=32)
    jax.block_until_ready(loss)

    loss_ref = smart_loss_ref(embed, state, attention_mask, w, b, noise)
    # bf16 noise stream + bf16 noise-dependent matmuls => slightly looser
    # tolerance than a pure-fp32 kernel (observed deviation is a few 1e-3 rel).
    assert jnp.allclose(loss, loss_ref, rtol=2e-2, atol=1e-6), (loss, loss_ref)

    print("KERNEL_OK")
</pallas_src>

<mosaic_0001>
module attributes {stable_mosaic.version = 11 : i64} {
  func.func @smart_loss_kernel(%arg0: i32, %arg1: memref<32x32xf32, #tpu.memory_space<vmem>>, %arg2: memref<32x32xbf16, #tpu.memory_space<vmem>>, %arg3: memref<32x128xf32, #tpu.memory_space<vmem>>, %arg4: memref<32x1xf32, #tpu.memory_space<vmem>>, %arg5: memref<32x128xf32, #tpu.memory_space<vmem>>, %arg6: memref<32x128xbf16, #tpu.memory_space<vmem>>, %arg7: memref<128x32xbf16, #tpu.memory_space<vmem>>, %arg8: memref<1x128xf32, #tpu.memory_space<vmem>>, %arg9: memref<1x1x128xf32, #tpu.memory_space<vmem>>) attributes {dimension_semantics = [#tpu.dimension_semantics<parallel>], iteration_bounds = array<i64: 3>, scalar_prefetch = 0 : i64, scratch_operands = 0 : i64, tpu.core_type = #tpu.core_type<tc>, window_params = [{transform_indices = @transform_0, window_bounds = array<i64: 32, 32>}, {transform_indices = @transform_1, window_bounds = array<i64: 32, 32>}, {transform_indices = @transform_2, window_bounds = array<i64: 32, 128>}, {transform_indices = @transform_3, window_bounds = array<i64: 32, 1>}, {pipeline_mode = #tpu.pipeline_mode<synchronous>, transform_indices = @transform_4, window_bounds = array<i64: 32, 128>}, {pipeline_mode = #tpu.pipeline_mode<synchronous>, transform_indices = @transform_5, window_bounds = array<i64: 32, 128>}, {pipeline_mode = #tpu.pipeline_mode<synchronous>, transform_indices = @transform_6, window_bounds = array<i64: 128, 32>}, {pipeline_mode = #tpu.pipeline_mode<synchronous>, transform_indices = @transform_7, window_bounds = array<i64: 1, 128>}, {transform_indices = @transform_8, window_bounds = array<i64: 1, 1, 128>}]} {
    %c0 = arith.constant 0 : index
    %c0_0 = arith.constant 0 : index
    %0 = vector.load %arg4[%c0, %c0_0] : memref<32x1xf32, #tpu.memory_space<vmem>>, vector<32x1xf32>
    %c0_1 = arith.constant 0 : index
    %c0_2 = arith.constant 0 : index
    %1 = vector.load %arg1[%c0_1, %c0_2] : memref<32x32xf32, #tpu.memory_space<vmem>>, vector<32x32xf32>
    %2 = vector.broadcast %0 : vector<32x1xf32> to vector<32x32xf32>
    %3 = arith.mulf %1, %2 : vector<32x32xf32>
    %c0_3 = arith.constant 0 : index
    %c0_4 = arith.constant 0 : index
    %4 = vector.load %arg3[%c0_3, %c0_4] : memref<32x128xf32, #tpu.memory_space<vmem>>, vector<32x128xf32>
    %c0_5 = arith.constant 0 : index
    %c0_6 = arith.constant 0 : index
    %5 = vector.load %arg5[%c0_5, %c0_6] : memref<32x128xf32, #tpu.memory_space<vmem>>, vector<32x128xf32>
    %c0_7 = arith.constant 0 : index
    %c0_8 = arith.constant 0 : index
    %6 = vector.load %arg6[%c0_7, %c0_8] : memref<32x128xbf16, #tpu.memory_space<vmem>>, vector<32x128xbf16>
    %c0_9 = arith.constant 0 : index
    %c0_10 = arith.constant 0 : index
    %7 = vector.load %arg7[%c0_9, %c0_10] : memref<128x32xbf16, #tpu.memory_space<vmem>>, vector<128x32xbf16>
    %c0_11 = arith.constant 0 : index
    %c0_12 = arith.constant 0 : index
    %8 = vector.load %arg8[%c0_11, %c0_12] : memref<1x128xf32, #tpu.memory_space<vmem>>, vector<1x128xf32>
    %cst = arith.constant dense<0.000000e+00> : vector<32x128xf32>
    %9 = tpu.matmul %3, %5, %cst {dimension_numbers = #tpu.dot_dimension_numbers<[1], [0], [0], [1], [0, 0, 1, 1], [], []>} : vector<32x32xf32>, vector<32x128xf32>, vector<32x128xf32> -> vector<32x128xf32>
    %10 = vector.broadcast %8 : vector<1x128xf32> to vector<32x128xf32>
    %11 = arith.addf %9, %10 : vector<32x128xf32>
    %12 = arith.subf %11, %4 : vector<32x128xf32>
    %c0_13 = arith.constant 0 : index
    %c0_14 = arith.constant 0 : index
    %13 = vector.load %arg2[%c0_13, %c0_14] : memref<32x32xbf16, #tpu.memory_space<vmem>>, vector<32x32xbf16>
    %14 = arith.extf %13 : vector<32x32xbf16> to vector<32x32xf32>
    %cst_15 = arith.constant 9.99999974E-6 : f32
    %15 = vector.broadcast %cst_15 : f32 to vector<32x1xf32>
    %16 = arith.mulf %15, %0 : vector<32x1xf32>
    %17 = vector.broadcast %16 : vector<32x1xf32> to vector<32x32xf32>
    %18 = arith.mulf %14, %17 : vector<32x32xf32>
    %19 = arith.truncf %18 : vector<32x32xf32> to vector<32x32xbf16>
    %cst_16 = arith.constant dense<0.000000e+00> : vector<32x128xf32>
    %20 = tpu.matmul %19, %6, %cst_16 {dimension_numbers = #tpu.dot_dimension_numbers<[1], [0], [0], [1], [0, 0, 1, 1], [], []>} : vector<32x32xbf16>, vector<32x128xbf16>, vector<32x128xf32> -> vector<32x128xf32>
    %21 = arith.addf %12, %20 : vector<32x128xf32>
    %22 = arith.truncf %21 : vector<32x128xf32> to vector<32x128xbf16>
    %cst_17 = arith.constant dense<0.000000e+00> : vector<32x32xf32>
    %23 = tpu.matmul %22, %7, %cst_17 {dimension_numbers = #tpu.dot_dimension_numbers<[1], [0], [0], [1], [0, 0, 1, 1], [], []>} : vector<32x128xbf16>, vector<128x32xbf16>, vector<32x32xf32> -> vector<32x32xf32>
    %cst_18 = arith.constant 3.125000e-03 : f32
    %24 = vector.broadcast %cst_18 : f32 to vector<32x32xf32>
    %25 = arith.mulf %24, %23 : vector<32x32xf32>
    %26 = vector.broadcast %0 : vector<32x1xf32> to vector<32x32xf32>
    %27 = arith.mulf %25, %26 : vector<32x32xf32>
    %cst_19 = arith.constant 1.000000e-03 : f32
    %28 = vector.broadcast %cst_19 : f32 to vector<32x32xf32>
    %29 = arith.mulf %28, %27 : vector<32x32xf32>
    %30 = arith.addf %18, %29 : vector<32x32xf32>
    %31 = math.absf %30 : vector<32x32xf32>
    %cst_20 = arith.constant dense<0xFF800000> : vector<32xf32>
    %32 = vector.multi_reduction <maximumf>, %31, %cst_20 [1] : vector<32x32xf32> to vector<32xf32>
    %33 = vector.shape_cast %32 : vector<32xf32> to vector<32x1xf32>
    %cst_21 = arith.constant 9.99999997E-7 : f32
    %34 = vector.broadcast %cst_21 : f32 to vector<32x1xf32>
    %35 = arith.addf %33, %34 : vector<32x1xf32>
    %36 = vector.broadcast %35 : vector<32x1xf32> to vector<32x32xf32>
    %37 = arith.divf %30, %36 : vector<32x32xf32>
    %38 = arith.truncf %37 : vector<32x32xf32> to vector<32x32xbf16>
    %cst_22 = arith.constant dense<0.000000e+00> : vector<32x128xf32>
    %39 = tpu.matmul %38, %6, %cst_22 {dimension_numbers = #tpu.dot_dimension_numbers<[1], [0], [0], [1], [0, 0, 1, 1], [], []>} : vector<32x32xbf16>, vector<32x128xbf16>, vector<32x128xf32> -> vector<32x128xf32>
    %40 = arith.addf %12, %39 : vector<32x128xf32>
    %41 = arith.mulf %40, %40 : vector<32x128xf32>
    %cst_23 = arith.constant dense<0.000000e+00> : vector<128xf32>
    %42 = vector.multi_reduction <add>, %41, %cst_23 [0] : vector<32x128xf32> to vector<128xf32>
    %43 = vector.shape_cast %42 : vector<128xf32> to vector<1x1x128xf32>
    %c0_24 = arith.constant 0 : index
    %c0_25 = arith.constant 0 : index
    %c0_26 = arith.constant 0 : index
    %44 = vector.load %arg9[%c0_24, %c0_25, %c0_26] : memref<1x1x128xf32, #tpu.memory_space<vmem>>, vector<1x1x128xf32>
    tpu.vector_store %arg9[%c0_24, %c0_25, %c0_26], %43 {strides = array<i32>} : memref<1x1x128xf32, #tpu.memory_space<vmem>>, vector<1x1x128xf32>,
    return
  }
  func.func @transform_0(%arg0: i32) -> (i32, i32) {
    %c0_i32 = arith.constant 0 : i32
    %c0_i32_0 = arith.constant 0 : i32
    return %arg0, %c0_i32 : i32, i32
  }
  func.func @transform_1(%arg0: i32) -> (i32, i32) {
    %c0_i32 = arith.constant 0 : i32
    %c0_i32_0 = arith.constant 0 : i32
    return %arg0, %c0_i32 : i32, i32
  }
  func.func @transform_2(%arg0: i32) -> (i32, i32) {
    %c0_i32 = arith.constant 0 : i32
    %c0_i32_0 = arith.constant 0 : i32
    return %arg0, %c0_i32 : i32, i32
  }
  func.func @transform_3(%arg0: i32) -> (i32, i32) {
    %c0_i32 = arith.constant 0 : i32
    %c0_i32_0 = arith.constant 0 : i32
    return %arg0, %c0_i32 : i32, i32
  }
  func.func @transform_4(%arg0: i32) -> (i32, i32) {
    %c0_i32 = arith.constant 0 : i32
    %c0_i32_0 = arith.constant 0 : i32
    %c0_i32_1 = arith.constant 0 : i32
    return %c0_i32, %c0_i32_0 : i32, i32
  }
  func.func @transform_5(%arg0: i32) -> (i32, i32) {
    %c0_i32 = arith.constant 0 : i32
    %c0_i32_0 = arith.constant 0 : i32
    %c0_i32_1 = arith.constant 0 : i32
    return %c0_i32, %c0_i32_0 : i32, i32
  }
  func.func @transform_6(%arg0: i32) -> (i32, i32) {
    %c0_i32 = arith.constant 0 : i32
    %c0_i32_0 = arith.constant 0 : i32
    %c0_i32_1 = arith.constant 0 : i32
    return %c0_i32, %c0_i32_0 : i32, i32
  }
  func.func @transform_7(%arg0: i32) -> (i32, i32) {
    %c0_i32 = arith.constant 0 : i32
    %c0_i32_0 = arith.constant 0 : i32
    %c0_i32_1 = arith.constant 0 : i32
    return %c0_i32, %c0_i32_0 : i32, i32
  }
  func.func @transform_8(%arg0: i32) -> (i32, i32, i32) {
    %c0_i32 = arith.constant 0 : i32
    %c0_i32_0 = arith.constant 0 : i32
    %c0_i32_1 = arith.constant 0 : i32
    return %arg0, %c0_i32, %c0_i32_0 : i32, i32, i32
  }
}

module attributes {stable_mosaic.version = 11 : i64} {
  func.func @smart_loss_kernel(%arg0: i32, %arg1: memref<32x32xf32, #tpu.memory_space<vmem>>, %arg2: memref<32x32xbf16, #tpu.memory_space<vmem>>, %arg3: memref<32x128xf32, #tpu.memory_space<vmem>>, %arg4: memref<32x1xf32, #tpu.memory_space<vmem>>, %arg5: memref<32x128xf32, #tpu.memory_space<vmem>>, %arg6: memref<32x128xbf16, #tpu.memory_space<vmem>>, %arg7: memref<128x32xbf16, #tpu.memory_space<vmem>>, %arg8: memref<1x128xf32, #tpu.memory_space<vmem>>, %arg9: memref<1x1x128xf32, #tpu.memory_space<vmem>>) attributes {dimension_semantics = [#tpu.dimension_semantics<parallel>], iteration_bounds = array<i64: 3>, scalar_prefetch = 0 : i64, scratch_operands = 0 : i64, tpu.core_type = #tpu.core_type<tc>, window_params = [{transform_indices = @transform_0, window_bounds = array<i64: 32, 32>}, {transform_indices = @transform_1, window_bounds = array<i64: 32, 32>}, {transform_indices = @transform_2, window_bounds = array<i64: 32, 128>}, {transform_indices = @transform_3, window_bounds = array<i64: 32, 1>}, {pipeline_mode = #tpu.pipeline_mode<synchronous>, transform_indices = @transform_4, window_bounds = array<i64: 32, 128>}, {pipeline_mode = #tpu.pipeline_mode<synchronous>, transform_indices = @transform_5, window_bounds = array<i64: 32, 128>}, {pipeline_mode = #tpu.pipeline_mode<synchronous>, transform_indices = @transform_6, window_bounds = array<i64: 128, 32>}, {pipeline_mode = #tpu.pipeline_mode<synchronous>, transform_indices = @transform_7, window_bounds = array<i64: 1, 128>}, {transform_indices = @transform_8, window_bounds = array<i64: 1, 1, 128>}]} {
    %c0 = arith.constant 0 : index
    %c0_0 = arith.constant 0 : index
    %0 = vector.load %arg4[%c0, %c0_0] : memref<32x1xf32, #tpu.memory_space<vmem>>, vector<32x1xf32>
    %c0_1 = arith.constant 0 : index
    %c0_2 = arith.constant 0 : index
    %1 = vector.load %arg1[%c0_1, %c0_2] : memref<32x32xf32, #tpu.memory_space<vmem>>, vector<32x32xf32>
    %2 = vector.broadcast %0 : vector<32x1xf32> to vector<32x32xf32>
    %3 = arith.mulf %1, %2 : vector<32x32xf32>
    %c0_3 = arith.constant 0 : index
    %c0_4 = arith.constant 0 : index
    %4 = vector.load %arg3[%c0_3, %c0_4] : memref<32x128xf32, #tpu.memory_space<vmem>>, vector<32x128xf32>
    %c0_5 = arith.constant 0 : index
    %c0_6 = arith.constant 0 : index
    %5 = vector.load %arg5[%c0_5, %c0_6] : memref<32x128xf32, #tpu.memory_space<vmem>>, vector<32x128xf32>
    %c0_7 = arith.constant 0 : index
    %c0_8 = arith.constant 0 : index
    %6 = vector.load %arg6[%c0_7, %c0_8] : memref<32x128xbf16, #tpu.memory_space<vmem>>, vector<32x128xbf16>
    %c0_9 = arith.constant 0 : index
    %c0_10 = arith.constant 0 : index
    %7 = vector.load %arg7[%c0_9, %c0_10] : memref<128x32xbf16, #tpu.memory_space<vmem>>, vector<128x32xbf16>
    %c0_11 = arith.constant 0 : index
    %c0_12 = arith.constant 0 : index
    %8 = vector.load %arg8[%c0_11, %c0_12] : memref<1x128xf32, #tpu.memory_space<vmem>>, vector<1x128xf32>
    %cst = arith.constant dense<0.000000e+00> : vector<32x128xf32>
    %9 = tpu.matmul %3, %5, %cst {dimension_numbers = #tpu.dot_dimension_numbers<[1], [0], [0], [1], [0, 0, 1, 1], [], []>} : vector<32x32xf32>, vector<32x128xf32>, vector<32x128xf32> -> vector<32x128xf32>
    %10 = vector.broadcast %8 : vector<1x128xf32> to vector<32x128xf32>
    %11 = arith.addf %9, %10 : vector<32x128xf32>
    %12 = arith.subf %11, %4 : vector<32x128xf32>
    %c0_13 = arith.constant 0 : index
    %c0_14 = arith.constant 0 : index
    %13 = vector.load %arg2[%c0_13, %c0_14] : memref<32x32xbf16, #tpu.memory_space<vmem>>, vector<32x32xbf16>
    %14 = arith.extf %13 : vector<32x32xbf16> to vector<32x32xf32>
    %cst_15 = arith.constant 9.99999974E-6 : f32
    %15 = vector.broadcast %cst_15 : f32 to vector<32x1xf32>
    %16 = arith.mulf %15, %0 : vector<32x1xf32>
    %17 = vector.broadcast %16 : vector<32x1xf32> to vector<32x32xf32>
    %18 = arith.mulf %14, %17 : vector<32x32xf32>
    %19 = arith.truncf %18 : vector<32x32xf32> to vector<32x32xbf16>
    %cst_16 = arith.constant dense<0.000000e+00> : vector<32x128xf32>
    %20 = tpu.matmul %19, %6, %cst_16 {dimension_numbers = #tpu.dot_dimension_numbers<[1], [0], [0], [1], [0, 0, 1, 1], [], []>} : vector<32x32xbf16>, vector<32x128xbf16>, vector<32x128xf32> -> vector<32x128xf32>
    %21 = arith.addf %12, %20 : vector<32x128xf32>
    %22 = arith.truncf %21 : vector<32x128xf32> to vector<32x128xbf16>
    %cst_17 = arith.constant dense<0.000000e+00> : vector<32x32xf32>
    %23 = tpu.matmul %22, %7, %cst_17 {dimension_numbers = #tpu.dot_dimension_numbers<[1], [0], [0], [1], [0, 0, 1, 1], [], []>} : vector<32x128xbf16>, vector<128x32xbf16>, vector<32x32xf32> -> vector<32x32xf32>
    %cst_18 = arith.constant 3.125000e-03 : f32
    %24 = vector.broadcast %cst_18 : f32 to vector<32x32xf32>
    %25 = arith.mulf %24, %23 : vector<32x32xf32>
    %26 = vector.broadcast %0 : vector<32x1xf32> to vector<32x32xf32>
    %27 = arith.mulf %25, %26 : vector<32x32xf32>
    %cst_19 = arith.constant 1.000000e-03 : f32
    %28 = vector.broadcast %cst_19 : f32 to vector<32x32xf32>
    %29 = arith.mulf %28, %27 : vector<32x32xf32>
    %30 = arith.addf %18, %29 : vector<32x32xf32>
    %31 = math.absf %30 : vector<32x32xf32>
    %cst_20 = arith.constant dense<0xFF800000> : vector<32xf32>
    %32 = vector.multi_reduction <maximumf>, %31, %cst_20 [1] : vector<32x32xf32> to vector<32xf32>
    %33 = vector.shape_cast %32 : vector<32xf32> to vector<32x1xf32>
    %cst_21 = arith.constant 9.99999997E-7 : f32
    %34 = vector.broadcast %cst_21 : f32 to vector<32x1xf32>
    %35 = arith.addf %33, %34 : vector<32x1xf32>
    %36 = vector.broadcast %35 : vector<32x1xf32> to vector<32x32xf32>
    %37 = arith.divf %30, %36 : vector<32x32xf32>
    %38 = arith.truncf %37 : vector<32x32xf32> to vector<32x32xbf16>
    %cst_22 = arith.constant dense<0.000000e+00> : vector<32x128xf32>
    %39 = tpu.matmul %38, %6, %cst_22 {dimension_numbers = #tpu.dot_dimension_numbers<[1], [0], [0], [1], [0, 0, 1, 1], [], []>} : vector<32x32xbf16>, vector<32x128xbf16>, vector<32x128xf32> -> vector<32x128xf32>
    %40 = arith.addf %12, %39 : vector<32x128xf32>
    %41 = arith.mulf %40, %40 : vector<32x128xf32>
    %cst_23 = arith.constant dense<0.000000e+00> : vector<128xf32>
    %42 = vector.multi_reduction <add>, %41, %cst_23 [0] : vector<32x128xf32> to vector<128xf32>
    %43 = vector.shape_cast %42 : vector<128xf32> to vector<1x1x128xf32>
    %c0_24 = arith.constant 0 : index
    %c0_25 = arith.constant 0 : index
    %c0_26 = arith.constant 0 : index
    %44 = vector.load %arg9[%c0_24, %c0_25, %c0_26] : memref<1x1x128xf32, #tpu.memory_space<vmem>>, vector<1x1x128xf32>
    tpu.vector_store %arg9[%c0_24, %c0_25, %c0_26], %43 {strides = array<i32>} : memref<1x1x128xf32, #tpu.memory_space<vmem>>, vector<1x1x128xf32>,
    return
  }
  func.func @transform_0(%arg0: i32) -> (i32, i32) {
    %c0_i32 = arith.constant 0 : i32
    %c0_i32_0 = arith.constant 0 : i32
    return %arg0, %c0_i32 : i32, i32
  }
  func.func @transform_1(%arg0: i32) -> (i32, i32) {
    %c0_i32 = arith.constant 0 : i32
    %c0_i32_0 = arith.constant 0 : i32
    return %arg0, %c0_i32 : i32, i32
  }
  func.func @transform_2(%arg0: i32) -> (i32, i32) {
    %c0_i32 = arith.constant 0 : i32
    %c0_i32_0 = arith.constant 0 : i32
    return %arg0, %c0_i32 : i32, i32
  }
  func.func @transform_3(%arg0: i32) -> (i32, i32) {
    %c0_i32 = arith.constant 0 : i32
    %c0_i32_0 = arith.constant 0 : i32
    return %arg0, %c0_i32 : i32, i32
  }
  func.func @transform_4(%arg0: i32) -> (i32, i32) {
    %c0_i32 = arith.constant 0 : i32
    %c0_i32_0 = arith.constant 0 : i32
    %c0_i32_1 = arith.constant 0 : i32
    return %c0_i32, %c0_i32_0 : i32, i32
  }
  func.func @transform_5(%arg0: i32) -> (i32, i32) {
    %c0_i32 = arith.constant 0 : i32
    %c0_i32_0 = arith.constant 0 : i32
    %c0_i32_1 = arith.constant 0 : i32
    return %c0_i32, %c0_i32_0 : i32, i32
  }
  func.func @transform_6(%arg0: i32) -> (i32, i32) {
    %c0_i32 = arith.constant 0 : i32
    %c0_i32_0 = arith.constant 0 : i32
    %c0_i32_1 = arith.constant 0 : i32
    return %c0_i32, %c0_i32_0 : i32, i32
  }
  func.func @transform_7(%arg0: i32) -> (i32, i32) {
    %c0_i32 = arith.constant 0 : i32
    %c0_i32_0 = arith.constant 0 : i32
    %c0_i32_1 = arith.constant 0 : i32
    return %c0_i32, %c0_i32_0 : i32, i32
  }
  func.func @transform_8(%arg0: i32) -> (i32, i32, i32) {
    %c0_i32 = arith.constant 0 : i32
    %c0_i32_0 = arith.constant 0 : i32
    %c0_i32_1 = arith.constant 0 : i32
    return %arg0, %c0_i32, %c0_i32_0 : i32, i32, i32
  }
}

</mosaic_0001>

<llo_original>
// kernel: tpu_custom_call.1
$region0: #{tpu_custom_call.1}
  #allocation0 [shape = 'u32[]', space=smem, size = 0x4, offset = 0x4, fixed_abs, tag = 'smem constant byte address 0x4 - core index']
  #allocation1 [shape = 'u32[144,128]{1,0:T(1,128)}', space=vmem, size = 0x12000, scoped, tag = 'internal scratch']
  %s0 = inlined_call_operand.vmem [shape: f32[96,32], index: 0, kind: input, shape index: {}]
  %s1 = inlined_call_operand.vmem [shape: bf16[96,32], index: 1, kind: input, shape index: {}]
  %s2 = inlined_call_operand.vmem [shape: f32[96,128], index: 2, kind: input, shape index: {}]
  %s3 = inlined_call_operand.vmem [shape: f32[96,1], index: 3, kind: input, shape index: {}]
  %s4 = inlined_call_operand.vmem [shape: f32[32,128], index: 4, kind: input, shape index: {}]
  %s5 = inlined_call_operand.vmem [shape: bf16[32,128], index: 5, kind: input, shape index: {}]
  %s6 = inlined_call_operand.vmem [shape: bf16[128,32], index: 6, kind: input, shape index: {}]
  %s7 = inlined_call_operand.vmem [shape: f32[1,128], index: 7, kind: input, shape index: {}]
  %s8 = inlined_call_operand.hbm [shape: f32[3,1,128], index: 8, kind: output, shape index: {}]
  %s9 = sld [smem:[#allocation0]]
  $region65: #{tpu_custom_call.1} parent=0
    _
  %s11 = ssub.s32 1, %s9
  %s12 = scalar_select 0, %s11, %s9
  $region1: #{tpu_custom_call.1} parent=0
    #allocation2 [shape = 'u8[1024]{0}', space=vmem, size = 0x400, scoped, tag = 'output window, operand 0']
    #allocation3 [shape = 's32[2]{0}', space=sflag, size = 0x8, scoped, tag = 'scoped memory for tpu_custom_call.1']
    %13 = vsyncpa [#allocation3], 0
    %s14 = scalar_lea.sflag [#allocation3], 1
    %15 = vsyncpa %s14, 0
    loop: start=0, step=1, limit=5
    $region2: #{tpu_custom_call.1} parent=1 // loop_pre_header
      _
    $region3: #{tpu_custom_call.1} parent=1 // loop_header
      %s17 = sphi 0, %s21
      %p18 = scmp.ge.s32.totalorder %s17, 5
      %s27 = sphi 0, %s29
      %s30 = sphi 0, %s27
      %s31 = sphi 0, %s30
      %s47 = sphi 0, %s31
      %s53 = sphi 0, %s55
      %s56 = sphi 0, %s53
      %s57 = sphi 0, %s56
      %s73 = sphi 0, %s57
      %s79 = sphi 0, %s81
      %s82 = sphi 0, %s79
      %s83 = sphi 0, %s82
      %s99 = sphi 0, %s83
      %s105 = sphi 0, %s107
      %s108 = sphi 0, %s105
      %s109 = sphi 0, %s108
      %s125 = sphi 0, %s109
      %s129 = sphi 0, %s129
      %s131 = sphi 0, %s129
      %s132 = sphi 0, %s131
      %s146 = sphi 0, %s132
      %s150 = sphi 0, %s150
      %s152 = sphi 0, %s150
      %s153 = sphi 0, %s152
      %s167 = sphi 0, %s153
      %s171 = sphi 0, %s171
      %s173 = sphi 0, %s171
      %s174 = sphi 0, %s173
      %s188 = sphi 0, %s174
      %s192 = sphi 0, %s192
      %s194 = sphi 0, %s192
      %s195 = sphi 0, %s194
      %s209 = sphi 0, %s195
      %s215 = sphi 0, %s217
      %s218 = sphi 0, %s215
      %s219 = sphi 0, %s218
      %s235 = sphi 0, %s219
    $region4: #{tpu_custom_call.1} parent=1 // loop_header_branch
      %20 = sbr.rel (%p18) target = $region8
    $region5: #{tpu_custom_call.1} parent=1 // loop_body
      %s22 = ssub.s32 %s17, 1
      %s23 = ssub.s32 %s17, 2
      %s24 = sadd.s32 %s17, 1
      %s25 = ssub.s32 %s17, %s24
      %p26 = scmp.eq.s32.totalorder %s25, 0
      %s28 = sadd.s32 %s27, 1
      %s29 = scalar_select %p26, %s27, %s28
      %p32 = pneg %p26
      %p33 = scmp.eq.s32.totalorder %s17, 2
      %p34 = por %p32, %p33
      %p35 = scmp.ne.s32.totalorder %s27, %s30
      %p36 = scmp.eq.s32.totalorder %s17, 0
      %p37 = por %p35, %p36
      %p38 = scmp.ne.s32.totalorder %s27, %s30
      %p39 = scmp.eq.s32.totalorder %s22, 2
      %p40 = por %p38, %p39
      %p41 = scmp.ne.s32.totalorder %s30, %s31
      %p42 = scmp.eq.s32.totalorder %s22, 0
      %p43 = por %p41, %p42
      %p44 = scmp.ne.s32.totalorder %s30, %s31
      %p45 = scmp.eq.s32.totalorder %s23, 2
      %p46 = por %p44, %p45
      %p48 = scmp.ne.s32.totalorder %s31, %s47
      %p49 = scmp.eq.s32.totalorder %s23, 0
      %p50 = por %p48, %p49
      %s51 = ssub.s32 %s17, %s24
      %p52 = scmp.eq.s32.totalorder %s51, 0
      %s54 = sadd.s32 %s53, 1
      %s55 = scalar_select %p52, %s53, %s54
      %p58 = pneg %p52
      %p59 = scmp.eq.s32.totalorder %s17, 2
      %p60 = por %p58, %p59
      %p61 = scmp.ne.s32.totalorder %s53, %s56
      %p62 = scmp.eq.s32.totalorder %s17, 0
      %p63 = por %p61, %p62
      %p64 = scmp.ne.s32.totalorder %s53, %s56
      %p65 = scmp.eq.s32.totalorder %s22, 2
      %p66 = por %p64, %p65
      %p67 = scmp.ne.s32.totalorder %s56, %s57
      %p68 = scmp.eq.s32.totalorder %s22, 0
      %p69 = por %p67, %p68
      %p70 = scmp.ne.s32.totalorder %s56, %s57
      %p71 = scmp.eq.s32.totalorder %s23, 2
      %p72 = por %p70, %p71
      %p74 = scmp.ne.s32.totalorder %s57, %s73
      %p75 = scmp.eq.s32.totalorder %s23, 0
      %p76 = por %p74, %p75
      %s77 = ssub.s32 %s17, %s24
      %p78 = scmp.eq.s32.totalorder %s77, 0
      %s80 = sadd.s32 %s79, 1
      %s81 = scalar_select %p78, %s79, %s80
      %p84 = pneg %p78
      %p85 = scmp.eq.s32.totalorder %s17, 2
      %p86 = por %p84, %p85
      %p87 = scmp.ne.s32.totalorder %s79, %s82
      %p88 = scmp.eq.s32.totalorder %s17, 0
      %p89 = por %p87, %p88
      %p90 = scmp.ne.s32.totalorder %s79, %s82
      %p91 = scmp.eq.s32.totalorder %s22, 2
      %p92 = por %p90, %p91
      %p93 = scmp.ne.s32.totalorder %s82, %s83
      %p94 = scmp.eq.s32.totalorder %s22, 0
      %p95 = por %p93, %p94
      %p96 = scmp.ne.s32.totalorder %s82, %s83
      %p97 = scmp.eq.s32.totalorder %s23, 2
      %p98 = por %p96, %p97
      %p100 = scmp.ne.s32.totalorder %s83, %s99
      %p101 = scmp.eq.s32.totalorder %s23, 0
      %p102 = por %p100, %p101
      %s103 = ssub.s32 %s17, %s24
      %p104 = scmp.eq.s32.totalorder %s103, 0
      %s106 = sadd.s32 %s105, 1
      %s107 = scalar_select %p104, %s105, %s106
      %p110 = pneg %p104
      %p111 = scmp.eq.s32.totalorder %s17, 2
      %p112 = por %p110, %p111
      %p113 = scmp.ne.s32.totalorder %s105, %s108
      %p114 = scmp.eq.s32.totalorder %s17, 0
      %p115 = por %p113, %p114
      %p116 = scmp.ne.s32.totalorder %s105, %s108
      %p117 = scmp.eq.s32.totalorder %s22, 2
      %p118 = por %p116, %p117
      %p119 = scmp.ne.s32.totalorder %s108, %s109
      %p120 = scmp.eq.s32.totalorder %s22, 0
      %p121 = por %p119, %p120
      %p122 = scmp.ne.s32.totalorder %s108, %s109
      %p123 = scmp.eq.s32.totalorder %s23, 2
      %p124 = por %p122, %p123
      %p126 = scmp.ne.s32.totalorder %s109, %s125
      %p127 = scmp.eq.s32.totalorder %s23, 0
      %p128 = por %p126, %p127
      %s130 = sadd.s32 %s129, 1
      %p133 = scmp.eq.s32.totalorder %s17, 2
      %p134 = scmp.ne.s32.totalorder %s129, %s131
      %p135 = scmp.eq.s32.totalorder %s17, 0
      %p136 = por %p134, %p135
      %p137 = scmp.ne.s32.totalorder %s129, %s131
      %p138 = scmp.eq.s32.totalorder %s22, 2
      %p139 = por %p137, %p138
      %p140 = scmp.ne.s32.totalorder %s131, %s132
      %p141 = scmp.eq.s32.totalorder %s22, 0
      %p142 = por %p140, %p141
      %p143 = scmp.ne.s32.totalorder %s131, %s132
      %p144 = scmp.eq.s32.totalorder %s23, 2
      %p145 = por %p143, %p144
      %p147 = scmp.ne.s32.totalorder %s132, %s146
      %p148 = scmp.eq.s32.totalorder %s23, 0
      %p149 = por %p147, %p148
      %s151 = sadd.s32 %s150, 1
      %p154 = scmp.eq.s32.totalorder %s17, 2
      %p155 = scmp.ne.s32.totalorder %s150, %s152
      %p156 = scmp.eq.s32.totalorder %s17, 0
      %p157 = por %p155, %p156
      %p158 = scmp.ne.s32.totalorder %s150, %s152
      %p159 = scmp.eq.s32.totalorder %s22, 2
      %p160 = por %p158, %p159
      %p161 = scmp.ne.s32.totalorder %s152, %s153
      %p162 = scmp.eq.s32.totalorder %s22, 0
      %p163 = por %p161, %p162
      %p164 = scmp.ne.s32.totalorder %s152, %s153
      %p165 = scmp.eq.s32.totalorder %s23, 2
      %p166 = por %p164, %p165
      %p168 = scmp.ne.s32.totalorder %s153, %s167
      %p169 = scmp.eq.s32.totalorder %s23, 0
      %p170 = por %p168, %p169
      %s172 = sadd.s32 %s171, 1
      %p175 = scmp.eq.s32.totalorder %s17, 2
      %p176 = scmp.ne.s32.totalorder %s171, %s173
      %p177 = scmp.eq.s32.totalorder %s17, 0
      %p178 = por %p176, %p177
      %p179 = scmp.ne.s32.totalorder %s171, %s173
      %p180 = scmp.eq.s32.totalorder %s22, 2
      %p181 = por %p179, %p180
      %p182 = scmp.ne.s32.totalorder %s173, %s174
      %p183 = scmp.eq.s32.totalorder %s22, 0
      %p184 = por %p182, %p183
      %p185 = scmp.ne.s32.totalorder %s173, %s174
      %p186 = scmp.eq.s32.totalorder %s23, 2
      %p187 = por %p185, %p186
      %p189 = scmp.ne.s32.totalorder %s174, %s188
      %p190 = scmp.eq.s32.totalorder %s23, 0
      %p191 = por %p189, %p190
      %s193 = sadd.s32 %s192, 1
      %p196 = scmp.eq.s32.totalorder %s17, 2
      %p197 = scmp.ne.s32.totalorder %s192, %s194
      %p198 = scmp.eq.s32.totalorder %s17, 0
      %p199 = por %p197, %p198
      %p200 = scmp.ne.s32.totalorder %s192, %s194
      %p201 = scmp.eq.s32.totalorder %s22, 2
      %p202 = por %p200, %p201
      %p203 = scmp.ne.s32.totalorder %s194, %s195
      %p204 = scmp.eq.s32.totalorder %s22, 0
      %p205 = por %p203, %p204
      %p206 = scmp.ne.s32.totalorder %s194, %s195
      %p207 = scmp.eq.s32.totalorder %s23, 2
      %p208 = por %p206, %p207
      %p210 = scmp.ne.s32.totalorder %s195, %s209
      %p211 = scmp.eq.s32.totalorder %s23, 0
      %p212 = por %p210, %p211
      %s213 = ssub.s32 %s17, %s24
      %p214 = scmp.eq.s32.totalorder %s213, 0
      %s216 = sadd.s32 %s215, 1
      %s217 = scalar_select %p214, %s215, %s216
      %p220 = pneg %p214
      %p221 = scmp.eq.s32.totalorder %s17, 2
      %p222 = por %p220, %p221
      %p223 = scmp.ne.s32.totalorder %s215, %s218
      %p224 = scmp.eq.s32.totalorder %s17, 0
      %p225 = por %p223, %p224
      %p226 = scmp.ne.s32.totalorder %s215, %s218
      %p227 = scmp.eq.s32.totalorder %s22, 2
      %p228 = por %p226, %p227
      %p229 = scmp.ne.s32.totalorder %s218, %s219
      %p230 = scmp.eq.s32.totalorder %s22, 0
      %p231 = por %p229, %p230
      %p232 = scmp.ne.s32.totalorder %s218, %s219
      %p233 = scmp.eq.s32.totalorder %s23, 2
      %p234 = por %p232, %p233
      %p236 = scmp.ne.s32.totalorder %s219, %s235
      %p237 = scmp.eq.s32.totalorder %s23, 0
      %p238 = por %p236, %p237
      %p239 = scmp.le.s32.totalorder 1, %s17
      %p240 = scmp.lt.s32.totalorder %s17, 4
      %p241 = pnand %p239, %p240
      %p242 = pneg %p241
      // Predicated region
      $region9: #{tpu_custom_call.1} parent=5 // pred_check
        _
      $region10: #{tpu_custom_call.1} parent=5 // pred_check_branch
        %244 = sbr.rel (%p241) target = $region12
      $region11: #{tpu_custom_call.1} parent=5 // pred_region
        %s245 = ssub.s32 %s17, 1
        // Predicated region
        $region13: #{tpu_custom_call.1} parent=11 // pred_check
          %p246 = pneg %p142
        $region14: #{tpu_custom_call.1} parent=11 // pred_check_branch
          %248 = sbr.rel (%p246) target = $region16
        $region15: #{tpu_custom_call.1} parent=11 // pred_region
          _
        $region16: #{tpu_custom_call.1} parent=11 // pred_fallthru
          _
        // Predicated region
        $region17: #{tpu_custom_call.1} parent=11 // pred_check
          %p249 = pneg %p163
        $region18: #{tpu_custom_call.1} parent=11 // pred_check_branch
          %251 = sbr.rel (%p249) target = $region20
        $region19: #{tpu_custom_call.1} parent=11 // pred_region
          _
        $region20: #{tpu_custom_call.1} parent=11 // pred_fallthru
          _
        // Predicated region
        $region21: #{tpu_custom_call.1} parent=11 // pred_check
          %p252 = pneg %p184
        $region22: #{tpu_custom_call.1} parent=11 // pred_check_branch
          %254 = sbr.rel (%p252) target = $region24
        $region23: #{tpu_custom_call.1} parent=11 // pred_region
          _
        $region24: #{tpu_custom_call.1} parent=11 // pred_fallthru
          _
        // Predicated region
        $region25: #{tpu_custom_call.1} parent=11 // pred_check
          %p255 = pneg %p205
        $region26: #{tpu_custom_call.1} parent=11 // pred_check_branch
          %257 = sbr.rel (%p255) target = $region28
        $region27: #{tpu_custom_call.1} parent=11 // pred_region
          _
        $region28: #{tpu_custom_call.1} parent=11 // pred_fallthru
          _
      $region12: #{tpu_custom_call.1} parent=5 // pred_fallthru
        _
      %p258 = scmp.lt.s32.totalorder %s17, 3
      // Predicated region
      $region29: #{tpu_custom_call.1} parent=5 // pred_check
        %p259 = pneg %p258
      $region30: #{tpu_custom_call.1} parent=5 // pred_check_branch
        %261 = sbr.rel (%p259) target = $region32
      $region31: #{tpu_custom_call.1} parent=5 // pred_region
        // Predicated region
        $region33: #{tpu_custom_call.1} parent=31 // pred_check
          %p262 = pneg %p37
        $region34: #{tpu_custom_call.1} parent=31 // pred_check_branch
          %264 = sbr.rel (%p262) target = $region36
        $region35: #{tpu_custom_call.1} parent=31 // pred_region
          %s265 = smul.u32 4, %s17
          %p266 = scmp.lt.s32.totalorder %s265, 11
          %s267 = scalar_select %p266, %s265, 11
          %s268 = smul.addr %s267, 8
          %s269 = scalar_lea.vmem %s0, %s268
          %s270 = smul.u32 4, %s17
        $region36: #{tpu_custom_call.1} parent=31 // pred_fallthru
          _
        // Predicated region
        $region37: #{tpu_custom_call.1} parent=31 // pred_check
          %p271 = pneg %p63
        $region38: #{tpu_custom_call.1} parent=31 // pred_check_branch
          %273 = sbr.rel (%p271) target = $region40
        $region39: #{tpu_custom_call.1} parent=31 // pred_region
          %s274 = smul.u32 4, %s17
          %p275 = scmp.lt.s32.totalorder %s274, 11
          %s276 = scalar_select %p275, %s274, 11
          %s277 = smul.addr %s276, 4
          %s278 = scalar_lea.vmem %s1, %s277
          %s279 = smul.u32 4, %s17
        $region40: #{tpu_custom_call.1} parent=31 // pred_fallthru
          _
        // Predicated region
        $region41: #{tpu_custom_call.1} parent=31 // pred_check
          %p280 = pneg %p89
        $region42: #{tpu_custom_call.1} parent=31 // pred_check_branch
          %282 = sbr.rel (%p280) target = $region44
        $region43: #{tpu_custom_call.1} parent=31 // pred_region
          %s283 = smul.u32 4, %s17
          %p284 = scmp.lt.s32.totalorder %s283, 11
          %s285 = scalar_select %p284, %s283, 11
          %s286 = smul.addr %s285, 8
          %s287 = scalar_lea.vmem %s2, %s286
          %s288 = smul.u32 4, %s17
        $region44: #{tpu_custom_call.1} parent=31 // pred_fallthru
          _
        // Predicated region
        $region45: #{tpu_custom_call.1} parent=31 // pred_check
          %p289 = pneg %p115
        $region46: #{tpu_custom_call.1} parent=31 // pred_check_branch
          %291 = sbr.rel (%p289) target = $region48
        $region47: #{tpu_custom_call.1} parent=31 // pred_region
          %s292 = smul.u32 4, %s17
          %p293 = scmp.lt.s32.totalorder %s292, 11
          %s294 = scalar_select %p293, %s292, 11
          %s295 = smul.addr %s294, 8
          %s296 = scalar_lea.vmem %s3, %s295
          %s297 = smul.u32 4, %s17
        $region48: #{tpu_custom_call.1} parent=31 // pred_fallthru
          _
      $region32: #{tpu_custom_call.1} parent=5 // pred_fallthru
        _
      %p298 = scmp.le.s32.totalorder 1, %s17
      %p299 = scmp.lt.s32.totalorder %s17, 4
      %p300 = pnand %p298, %p299
      %p301 = pneg %p300
      // Predicated region
      $region49: #{tpu_custom_call.1} parent=5 // pred_check
        _
      $region50: #{tpu_custom_call.1} parent=5 // pred_check_branch
        %303 = sbr.rel (%p300) target = $region52
      $region51: #{tpu_custom_call.1} parent=5 // pred_region
        %s304 = ssub.s32 %s17, 1
        %s305 = smul.u32 4, %s22
        %p306 = scmp.lt.s32.totalorder %s305, 11
        %s307 = scalar_select %p306, %s305, 11
        %s308 = smul.addr %s307, 8
        %s309 = scalar_lea.vmem %s0, %s308
        %p310 = pneg %p43
        %p311 = pneg %p40
        %s312 = smul.u32 4, %s22
        %p313 = scmp.lt.s32.totalorder %s312, 11
        %s314 = scalar_select %p313, %s312, 11
        %s315 = smul.addr %s314, 4
        %s316 = scalar_lea.vmem %s1, %s315
        %p317 = pneg %p69
        %p318 = pneg %p66
        %s319 = smul.u32 4, %s22
        %p320 = scmp.lt.s32.totalorder %s319, 11
        %s321 = scalar_select %p320, %s319, 11
        %s322 = smul.addr %s321, 8
        %s323 = scalar_lea.vmem %s2, %s322
        %p324 = pneg %p95
        %p325 = pneg %p92
        %s326 = smul.u32 4, %s22
        %p327 = scmp.lt.s32.totalorder %s326, 11
        %s328 = scalar_select %p327, %s326, 11
        %s329 = smul.addr %s328, 8
        %s330 = scalar_lea.vmem %s3, %s329
        %p331 = pneg %p121
        %p332 = pneg %p118
        %p333 = pneg %p142
        %p334 = pneg %p139
        %p335 = pneg %p163
        %p336 = pneg %p160
        %p337 = pneg %p184
        %p338 = pneg %p181
        %p339 = pneg %p205
        %p340 = pneg %p202
        %p341 = pneg %p231
        %p342 = pneg %p228
        %s343 = sand.u32 %s218, 1
        %s344 = scalar_lea.sflag [#allocation3], %s343
        %s345 = sand.u32 %s218, 1
        %s346 = scalar_lea.vmem [#allocation2], %s345
        %s347 = smul.u32 4, %s22
        %p348 = scmp.lt.s32.totalorder %s347, 11
        %s349 = scalar_select %p348, %s347, 11
        %s350 = smul.addr %s349, 8
        %s351 = scalar_lea.vmem %s0, %s350
        %s352 = smul.u32 4, %s22
        %s353 = smul.u32 4, %s22
        %p354 = scmp.lt.s32.totalorder %s353, 11
        %s355 = scalar_select %p354, %s353, 11
        %s356 = smul.addr %s355, 4
        %s357 = scalar_lea.vmem %s1, %s356
        %s358 = smul.u32 4, %s22
        %s359 = smul.u32 4, %s22
        %p360 = scmp.lt.s32.totalorder %s359, 11
        %s361 = scalar_select %p360, %s359, 11
        %s362 = smul.addr %s361, 8
        %s363 = scalar_lea.vmem %s2, %s362
        %s364 = smul.u32 4, %s22
        %s365 = smul.u32 4, %s22
        %p366 = scmp.lt.s32.totalorder %s365, 11
        %s367 = scalar_select %p366, %s365, 11
        %s368 = smul.addr %s367, 8
        %s369 = scalar_lea.vmem %s3, %s368
        %s370 = smul.u32 4, %s22
        %v372 = vld [vmem:[%s369] sm:$0xff]
        %v373 = vld [vmem:[%s369 + $0x8] sm:$0xff]
        %v374 = vld [vmem:[%s369 + $0x10] sm:$0xff]
        %v375 = vld [vmem:[%s369 + $0x18] sm:$0xff]
        %v376 = vld [vmem:[%s351] sm:$0xff]
        %v377 = vld [vmem:[%s351 + $0x8] sm:$0xff]
        %v378 = vld [vmem:[%s351 + $0x10] sm:$0xff]
        %v379 = vld [vmem:[%s351 + $0x18] sm:$0xff]
        %381 = vset.pattern.permute.xlu0 0
        %382 = vperm.xlu0 %381, %v372
        %v383 = vpop.permute.xlu0 %382
        %386 = vset.pattern.permute.xlu0 0
        %387 = vperm.xlu0 %386, %v373
        %v388 = vpop.permute.xlu0 %387
        %391 = vset.pattern.permute.xlu0 0
        %392 = vperm.xlu0 %391, %v374
        %v393 = vpop.permute.xlu0 %392
        %396 = vset.pattern.permute.xlu0 0
        %397 = vperm.xlu0 %396, %v375
        %v398 = vpop.permute.xlu0 %397
        %v400 = vmul.f32 %v376, %v383
        %v401 = vmul.f32 %v377, %v388
        %v402 = vmul.f32 %v378, %v393
        %v403 = vmul.f32 %v379, %v398
        %v404 = vld [vmem:[%s363] sm:$0xff]
        %v405 = vld [vmem:[%s363 + $0x8] sm:$0xff]
        %v406 = vld [vmem:[%s363 + $0x10] sm:$0xff]
        %v407 = vld [vmem:[%s363 + $0x18] sm:$0xff]
        %v408 = vld [vmem:[%s4] sm:$0xff]
        %v409 = vld [vmem:[%s4 + $0x8] sm:$0xff]
        %v410 = vld [vmem:[%s4 + $0x10] sm:$0xff]
        %v411 = vld [vmem:[%s4 + $0x18] sm:$0xff]
        %v412 = vld [vmem:[%s5] sm:$0xf]
        %v413 = vld [vmem:[%s5 + $0x4] sm:$0xf]
        %v414 = vld [vmem:[%s5 + $0x8] sm:$0xf]
        %v415 = vld [vmem:[%s5 + $0xc] sm:$0xf]
        %v416 = vld [vmem:[%s6] sm:$0xf]
        %v417 = vld [vmem:[%s6 + $0x4] sm:$0xf]
        %v418 = vld [vmem:[%s6 + $0x8] sm:$0xf]
        %v419 = vld [vmem:[%s6 + $0xc] sm:$0xf]
        %v420 = vld [vmem:[%s6 + $0x10] sm:$0xf]
        %v421 = vld [vmem:[%s6 + $0x14] sm:$0xf]
        %v422 = vld [vmem:[%s6 + $0x18] sm:$0xf]
        %v423 = vld [vmem:[%s6 + $0x1c] sm:$0xf]
        %v424 = vld [vmem:[%s6 + $0x20] sm:$0xf]
        %v425 = vld [vmem:[%s6 + $0x24] sm:$0xf]
        %v426 = vld [vmem:[%s6 + $0x28] sm:$0xf]
        %v427 = vld [vmem:[%s6 + $0x2c] sm:$0xf]
        %v428 = vld [vmem:[%s6 + $0x30] sm:$0xf]
        %v429 = vld [vmem:[%s6 + $0x34] sm:$0xf]
        %v430 = vld [vmem:[%s6 + $0x38] sm:$0xf]
        %v431 = vld [vmem:[%s6 + $0x3c] sm:$0xf]
        %v432 = vld [vmem:[%s7] sm:$0x1]
        %v434 = vlaneseq
        %v435 = vshrl.u32 %v434, 7
        %v436 = vsub.s32 0, %v435
        %v437 = vrot.slane %v432, %v436
        %vm439 = vcmask 261120
        %v441 = vsel %vm439, %v400, 0
        %v444 = vsel %vm439, %v401, 0
        %v447 = vsel %vm439, %v402, 0
        %v450 = vsel %vm439, %v403, 0
        %452 = vmatprep.subr.mxu0 0.0
        %453 = vmatpush1.msra.mxu0 %v408
        %454 = vmatprep.subr.mxu0 0.0
        %455 = vmatpush1.msra.mxu0 %v409
        %456 = vmatprep.subr.mxu0 0.0
        %457 = vmatpush1.msra.mxu0 %v410
        %458 = vmatprep.subr.mxu0 0.0
        %459 = vmatpush1.msra.mxu0 %v411
        %460 = vmatprep.subr.mxu0 0.0
        %461 = vmatpush1.msra.mxu0 0.0
        %462 = vmatprep.subr.mxu0 0.0
        %463 = vmatpush1.msra.mxu0 0.0
        %464 = vmatprep.subr.mxu0 0.0
        %465 = vmatpush1.msra.mxu0 0.0
        %466 = vmatprep.subr.mxu0 0.0
        %467 = vmatpush1.msra.mxu0 0.0
        %468 = vmatprep.subr.mxu0 0.0
        %469 = vmatpush1.msra.mxu0 0.0
        %470 = vmatprep.subr.mxu0 0.0
        %471 = vmatpush1.msra.mxu0 0.0
        %472 = vmatprep.subr.mxu0 0.0
        %473 = vmatpush1.msra.mxu0 0.0
        %474 = vmatprep.subr.mxu0 0.0
        %475 = vmatpush1.msra.mxu0 0.0
        %476 = vmatprep.subr.mxu0 0.0
        %477 = vmatpush1.msra.mxu0 0.0
        %478 = vmatprep.subr.mxu0 0.0
        %479 = vmatpush1.msra.mxu0 0.0
        %480 = vmatprep.subr.mxu0 0.0
        %481 = vmatpush1.msra.mxu0 0.0
        %482 = vmatprep.subr.mxu0 0.0
        %483 = vmatpush1.msra.mxu0 0.0
        %484 = vmatprep.subr.mxu0 0.0
        %485 = vmatpush1.msra.mxu0 0.0
        %486 = vmatprep.subr.mxu0 0.0
        %487 = vmatpush1.msra.mxu0 0.0
        %488 = vmatprep.subr.mxu0 0.0
        %489 = vmatpush1.msra.mxu0 0.0
        %490 = vmatprep.subr.mxu0 0.0
        %491 = vmatpush1.msra.mxu0 0.0
        %492 = vmatprep.subr.mxu0 0.0
        %493 = vmatpush1.msra.mxu0 0.0
        %494 = vmatprep.subr.mxu0 0.0
        %495 = vmatpush1.msra.mxu0 0.0
        %496 = vmatprep.subr.mxu0 0.0
        %497 = vmatpush1.msra.mxu0 0.0
        %498 = vmatprep.subr.mxu0 0.0
        %499 = vmatpush1.msra.mxu0 0.0
        %500 = vmatprep.subr.mxu0 0.0
        %501 = vmatpush1.msra.mxu0 0.0
        %502 = vmatprep.subr.mxu0 0.0
        %503 = vmatpush1.msra.mxu0 0.0
        %504 = vmatprep.subr.mxu0 0.0
        %505 = vmatpush1.msra.mxu0 0.0
        %506 = vmatprep.subr.mxu0 0.0
        %507 = vmatpush1.msra.mxu0 0.0
        %508 = vmatprep.subr.mxu0 0.0
        %509 = vmatpush1.msra.mxu0 0.0
        %510 = vmatprep.subr.mxu0 0.0
        %511 = vmatpush1.msra.mxu0 0.0
        %512 = vmatprep.subr.mxu0 0.0
        %513 = vmatpush1.msra.mxu0 0.0
        %514 = vmatprep.subr.mxu0 0.0
        %515 = vmatpush1.msra.mxu0 0.0
        %516 = vmatprep.mubr.f32.mxu0 0.0
        %517 = vmatmul.mubr.f32.gmra.mrb[0].mxu0 %v441
        %v518 = vpop.f32.mrb[0].mxu0
        %v519 = vadd.f32 %v437, %v518
        %v520 = vpop.f32.mrb[0].mxu0
        %521 = vmatprep.mubr.f32.mxu0 0.0
        %522 = vmatmul.mubr.f32.gmra.mrb[0].mxu0 %v444
        %v523 = vpop.f32.mrb[0].mxu0
        %v524 = vadd.f32 %v437, %v523
        %v525 = vpop.f32.mrb[0].mxu0
        %526 = vmatprep.mubr.f32.mxu0 0.0
        %527 = vmatmul.mubr.f32.gmra.mrb[0].mxu0 %v447
        %v528 = vpop.f32.mrb[0].mxu0
        %v529 = vadd.f32 %v437, %v528
        %v530 = vpop.f32.mrb[0].mxu0
        %531 = vmatprep.mubr.f32.mxu0 0.0
        %532 = vmatmul.mubr.f32.gmra.mrb[0].mxu0 %v450
        %v533 = vpop.f32.mrb[0].mxu0
        %v534 = vadd.f32 %v437, %v533
        %v535 = vpop.f32.mrb[0].mxu0
        %536 = vdwg.mxu0
        %v537 = vsub.f32 %v519, %v404
        %v538 = vsub.f32 %v524, %v405
        %v539 = vsub.f32 %v529, %v406
        %v540 = vsub.f32 %v534, %v407
        %v541 = vld [vmem:[%s357] sm:$0xf]
        %v542 = vld [vmem:[%s357 + $0x4] sm:$0xf]
        %v543 = vld [vmem:[%s357 + $0x8] sm:$0xf]
        %v544 = vld [vmem:[%s357 + $0xc] sm:$0xf]
        %v545 = vunpack.c.l.bf16 %v541
        %v546 = vunpack.c.l.bf16 %v542
        %v547 = vunpack.c.l.bf16 %v543
        %v548 = vunpack.c.l.bf16 %v544
        %v549 = vmul.f32 %v372, 1e-05
        %v550 = vmul.f32 %v373, 1e-05
        %v551 = vmul.f32 %v374, 1e-05
        %v552 = vmul.f32 %v375, 1e-05
        %554 = vset.pattern.permute.xlu0 0
        %555 = vperm.xlu0 %554, %v549
        %v556 = vpop.permute.xlu0 %555
        %559 = vset.pattern.permute.xlu0 0
        %560 = vperm.xlu0 %559, %v550
        %v561 = vpop.permute.xlu0 %560
        %564 = vset.pattern.permute.xlu0 0
        %565 = vperm.xlu0 %564, %v551
        %v566 = vpop.permute.xlu0 %565
        %569 = vset.pattern.permute.xlu0 0
        %570 = vperm.xlu0 %569, %v552
        %v571 = vpop.permute.xlu0 %570
        %v573 = vmul.f32 %v545, %v556
        %v574 = vmul.f32 %v546, %v561
        %v575 = vmul.f32 %v547, %v566
        %v576 = vmul.f32 %v548, %v571
        %v577 = vpack.c.bf16 %v574, %v573
        %v578 = vpack.c.bf16 %v576, %v575
        %v583 = vunpack.c.l.b16 %v412
        %v584 = vunpack.c.l.b16 %v413
        %v585 = vunpack.c.l.b16 %v414
        %v586 = vunpack.c.l.b16 %v415
        %v587 = vpack.c.b16 %v584, %v583
        %v588 = vpack.c.b16 %v586, %v585
        %v592 = vsel %vm439, %v577, 0
        %v595 = vsel %vm439, %v578, 0
        %597 = vmatprep.subr.bf16.mxu0 0
        %598 = vmatpush1.bf16.msra.mxu0 %v587
        %599 = vmatprep.subr.bf16.mxu0 0
        %600 = vmatpush1.bf16.msra.mxu0 %v588
        %601 = vmatprep.subr.bf16.mxu0 0
        %602 = vmatpush1.bf16.msra.mxu0 0
        %603 = vmatprep.subr.bf16.mxu0 0
        %604 = vmatpush1.bf16.msra.mxu0 0
        %605 = vmatprep.subr.bf16.mxu0 0
        %606 = vmatpush1.bf16.msra.mxu0 0
        %607 = vmatprep.subr.bf16.mxu0 0
        %608 = vmatpush1.bf16.msra.mxu0 0
        %609 = vmatprep.subr.bf16.mxu0 0
        %610 = vmatpush1.bf16.msra.mxu0 0
        %611 = vmatprep.subr.bf16.mxu0 0
        %612 = vmatpush1.bf16.msra.mxu0 0
        %613 = vmatprep.subr.bf16.mxu0 0
        %614 = vmatpush1.bf16.msra.mxu0 0
        %615 = vmatprep.subr.bf16.mxu0 0
        %616 = vmatpush1.bf16.msra.mxu0 0
        %617 = vmatprep.subr.bf16.mxu0 0
        %618 = vmatpush1.bf16.msra.mxu0 0
        %619 = vmatprep.subr.bf16.mxu0 0
        %620 = vmatpush1.bf16.msra.mxu0 0
        %621 = vmatprep.subr.bf16.mxu0 0
        %622 = vmatpush1.bf16.msra.mxu0 0
        %623 = vmatprep.subr.bf16.mxu0 0
        %624 = vmatpush1.bf16.msra.mxu0 0
        %625 = vmatprep.subr.bf16.mxu0 0
        %626 = vmatpush1.bf16.msra.mxu0 0
        %627 = vmatprep.subr.bf16.mxu0 0
        %628 = vmatpush1.bf16.msra.mxu0 0
        %629 = vmatprep.mubr.bf16.mxu0 0
        %630 = vmatmul.mubr.bf16.gmra.mrb[0].mxu0 %v592
        %v631 = vpop.f32.mrb[0].mxu0
        %v632 = vadd.f32 0.0, %v631
        %v633 = vpop.f32.mrb[0].mxu0
        %v634 = vpop.f32.mrb[0].mxu0
        %v635 = vadd.f32 0.0, %v634
        %v636 = vpop.f32.mrb[0].mxu0
        %637 = vmatprep.mubr.bf16.mxu0 0
        %638 = vmatmul.mubr.bf16.gmra.mrb[0].mxu0 %v595
        %v639 = vpop.f32.mrb[0].mxu0
        %v640 = vadd.f32 0.0, %v639
        %v641 = vpop.f32.mrb[0].mxu0
        %v642 = vpop.f32.mrb[0].mxu0
        %v643 = vadd.f32 0.0, %v642
        %v644 = vpop.f32.mrb[0].mxu0
        %645 = vdwg.mxu0
        %v646 = vadd.f32 %v537, %v632
        %v647 = vadd.f32 %v538, %v635
        %v648 = vadd.f32 %v539, %v640
        %v649 = vadd.f32 %v540, %v643
        %v650 = vpack.c.bf16 %v647, %v646
        %v651 = vpack.c.bf16 %v649, %v648
        %v668 = vunpack.c.l.b16 %v416
        %v669 = vunpack.c.l.b16 %v417
        %v670 = vunpack.c.l.b16 %v418
        %v671 = vunpack.c.l.b16 %v419
        %v672 = vunpack.c.l.b16 %v420
        %v673 = vunpack.c.l.b16 %v421
        %v674 = vunpack.c.l.b16 %v422
        %v675 = vunpack.c.l.b16 %v423
        %v676 = vunpack.c.l.b16 %v424
        %v677 = vunpack.c.l.b16 %v425
        %v678 = vunpack.c.l.b16 %v426
        %v679 = vunpack.c.l.b16 %v427
        %v680 = vunpack.c.l.b16 %v428
        %v681 = vunpack.c.l.b16 %v429
        %v682 = vunpack.c.l.b16 %v430
        %v683 = vunpack.c.l.b16 %v431
        %v684 = vpack.c.b16 %v669, %v668
        %v685 = vpack.c.b16 %v671, %v670
        %v686 = vpack.c.b16 %v673, %v672
        %v687 = vpack.c.b16 %v675, %v674
        %v688 = vpack.c.b16 %v677, %v676
        %v689 = vpack.c.b16 %v679, %v678
        %v690 = vpack.c.b16 %v681, %v680
        %v691 = vpack.c.b16 %v683, %v682
        %700 = vmatprep.subr.bf16.mxu0 0
        %701 = vmatpush1.bf16.msra.mxu0 %v684
        %702 = vmatprep.subr.bf16.mxu0 0
        %703 = vmatpush1.bf16.msra.mxu0 %v685
        %704 = vmatprep.subr.bf16.mxu0 0
        %705 = vmatpush1.bf16.msra.mxu0 %v686
        %706 = vmatprep.subr.bf16.mxu0 0
        %707 = vmatpush1.bf16.msra.mxu0 %v687
        %708 = vmatprep.subr.bf16.mxu0 0
        %709 = vmatpush1.bf16.msra.mxu0 %v688
        %710 = vmatprep.subr.bf16.mxu0 0
        %711 = vmatpush1.bf16.msra.mxu0 %v689
        %712 = vmatprep.subr.bf16.mxu0 0
        %713 = vmatpush1.bf16.msra.mxu0 %v690
        %714 = vmatprep.subr.bf16.mxu0 0
        %715 = vmatpush1.bf16.msra.mxu0 %v691
        %716 = vmatprep.subr.bf16.mxu0 0
        %717 = vmatpush1.bf16.msra.mxu0 0
        %718 = vmatprep.subr.bf16.mxu0 0
        %719 = vmatpush1.bf16.msra.mxu0 0
        %720 = vmatprep.subr.bf16.mxu0 0
        %721 = vmatpush1.bf16.msra.mxu0 0
        %722 = vmatprep.subr.bf16.mxu0 0
        %723 = vmatpush1.bf16.msra.mxu0 0
        %724 = vmatprep.subr.bf16.mxu0 0
        %725 = vmatpush1.bf16.msra.mxu0 0
        %726 = vmatprep.subr.bf16.mxu0 0
        %727 = vmatpush1.bf16.msra.mxu0 0
        %728 = vmatprep.subr.bf16.mxu0 0
        %729 = vmatpush1.bf16.msra.mxu0 0
        %730 = vmatprep.subr.bf16.mxu0 0
        %731 = vmatpush1.bf16.msra.mxu0 0
        %732 = vmatprep.mubr.bf16.mxu0 0
        %733 = vmatmul.mubr.bf16.gmra.mrb[0].mxu0 %v650
        %v734 = vpop.f32.mrb[0].mxu0
        %v735 = vadd.f32 0.0, %v734
        %v736 = vpop.f32.mrb[0].mxu0
        %v737 = vpop.f32.mrb[0].mxu0
        %v738 = vadd.f32 0.0, %v737
        %v739 = vpop.f32.mrb[0].mxu0
        %740 = vmatprep.mubr.bf16.mxu0 0
        %741 = vmatmul.mubr.bf16.gmra.mrb[0].mxu0 %v651
        %v742 = vpop.f32.mrb[0].mxu0
        %v743 = vadd.f32 0.0, %v742
        %v744 = vpop.f32.mrb[0].mxu0
        %v745 = vpop.f32.mrb[0].mxu0
        %v746 = vadd.f32 0.0, %v745
        %v747 = vpop.f32.mrb[0].mxu0
        %748 = vdwg.mxu0
        %v749 = vmul.f32 %v735, 0.003125
        %v750 = vmul.f32 %v738, 0.003125
        %v751 = vmul.f32 %v743, 0.003125
        %v752 = vmul.f32 %v746, 0.003125
        %v753 = vmul.f32 %v749, %v383
        %v754 = vmul.f32 %v750, %v388
        %v755 = vmul.f32 %v751, %v393
        %v756 = vmul.f32 %v752, %v398
        %v757 = vmul.f32 %v753, 0.001
        %v758 = vmul.f32 %v754, 0.001
        %v759 = vmul.f32 %v755, 0.001
        %v760 = vmul.f32 %v756, 0.001
        %v761 = vadd.f32 %v573, %v757
        %v762 = vadd.f32 %v574, %v758
        %v763 = vadd.f32 %v575, %v759
        %v764 = vadd.f32 %v576, %v760
        %v765 = vand.u32 2147483647, %v761
        %v766 = vand.u32 2147483647, %v762
        %v767 = vand.u32 2147483647, %v763
        %v768 = vand.u32 2147483647, %v764
        %v769 = vsel %vm439, %v765, -inf
        %770 = vmax.xlane.f32.xlu0 %v769
        %v771 = vpop.xlane.xlu0 %770
        %v772 = vsel %vm439, %v766, -inf
        %773 = vmax.xlane.f32.xlu0 %v772
        %v774 = vpop.xlane.xlu0 %773
        %v775 = vsel %vm439, %v767, -inf
        %776 = vmax.xlane.f32.xlu0 %v775
        %v777 = vpop.xlane.xlu0 %776
        %v778 = vsel %vm439, %v768, -inf
        %779 = vmax.xlane.f32.xlu0 %v778
        %v780 = vpop.xlane.xlu0 %779
        %v781 = vadd.f32 %v771, 1e-06
        %v782 = vadd.f32 %v774, 1e-06
        %v783 = vadd.f32 %v777, 1e-06
        %v784 = vadd.f32 %v780, 1e-06
        %v785 = vrcp.pop %v781
        %v786 = vmul.f32 %v761, %v785
        %v787 = vrcp.pop %v782
        %v788 = vmul.f32 %v762, %v787
        %v789 = vrcp.pop %v783
        %v790 = vmul.f32 %v763, %v789
        %v791 = vrcp.pop %v784
        %v792 = vmul.f32 %v764, %v791
        %v793 = vpack.c.bf16 %v788, %v786
        %v794 = vpack.c.bf16 %v792, %v790
        %v796 = vsel %vm439, %v793, 0
        %v799 = vsel %vm439, %v794, 0
        %801 = vmatprep.subr.bf16.mxu0 0
        %802 = vmatpush1.bf16.msra.mxu0 %v587
        %803 = vmatprep.subr.bf16.mxu0 0
        %804 = vmatpush1.bf16.msra.mxu0 %v588
        %805 = vmatprep.subr.bf16.mxu0 0
        %806 = vmatpush1.bf16.msra.mxu0 0
        %807 = vmatprep.subr.bf16.mxu0 0
        %808 = vmatpush1.bf16.msra.mxu0 0
        %809 = vmatprep.subr.bf16.mxu0 0
        %810 = vmatpush1.bf16.msra.mxu0 0
        %811 = vmatprep.subr.bf16.mxu0 0
        %812 = vmatpush1.bf16.msra.mxu0 0
        %813 = vmatprep.subr.bf16.mxu0 0
        %814 = vmatpush1.bf16.msra.mxu0 0
        %815 = vmatprep.subr.bf16.mxu0 0
        %816 = vmatpush1.bf16.msra.mxu0 0
        %817 = vmatprep.subr.bf16.mxu0 0
        %818 = vmatpush1.bf16.msra.mxu0 0
        %819 = vmatprep.subr.bf16.mxu0 0
        %820 = vmatpush1.bf16.msra.mxu0 0
        %821 = vmatprep.subr.bf16.mxu0 0
        %822 = vmatpush1.bf16.msra.mxu0 0
        %823 = vmatprep.subr.bf16.mxu0 0
        %824 = vmatpush1.bf16.msra.mxu0 0
        %825 = vmatprep.subr.bf16.mxu0 0
        %826 = vmatpush1.bf16.msra.mxu0 0
        %827 = vmatprep.subr.bf16.mxu0 0
        %828 = vmatpush1.bf16.msra.mxu0 0
        %829 = vmatprep.subr.bf16.mxu0 0
        %830 = vmatpush1.bf16.msra.mxu0 0
        %831 = vmatprep.subr.bf16.mxu0 0
        %832 = vmatpush1.bf16.msra.mxu0 0
        %833 = vmatprep.mubr.bf16.mxu0 0
        %834 = vmatmul.mubr.bf16.gmra.mrb[0].mxu0 %v796
        %v835 = vpop.f32.mrb[0].mxu0
        %v836 = vadd.f32 0.0, %v835
        %v837 = vpop.f32.mrb[0].mxu0
        %v838 = vpop.f32.mrb[0].mxu0
        %v839 = vadd.f32 0.0, %v838
        %v840 = vpop.f32.mrb[0].mxu0
        %841 = vmatprep.mubr.bf16.mxu0 0
        %842 = vmatmul.mubr.bf16.gmra.mrb[0].mxu0 %v799
        %v843 = vpop.f32.mrb[0].mxu0
        %v844 = vadd.f32 0.0, %v843
        %v845 = vpop.f32.mrb[0].mxu0
        %v846 = vpop.f32.mrb[0].mxu0
        %v847 = vadd.f32 0.0, %v846
        %v848 = vpop.f32.mrb[0].mxu0
        %849 = vdwg.mxu0
        %v850 = vadd.f32 %v537, %v836
        %v851 = vadd.f32 %v538, %v839
        %v852 = vadd.f32 %v539, %v844
        %v853 = vadd.f32 %v540, %v847
        %v854 = vmul.f32 %v850, %v850
        %v855 = vmul.f32 %v851, %v851
        %v856 = vmul.f32 %v852, %v852
        %v857 = vmul.f32 %v853, %v853
        %v858 = vadd.f32 %v854, %v855
        %v859 = vadd.f32 %v858, %v856
        %v860 = vadd.f32 %v859, %v857
        %v861 = vrot.slane %v860, 4
        %v862 = vadd.f32 %v860, %v861
        %v863 = vrot.slane %v862, 2
        %v864 = vadd.f32 %v862, %v863
        %v865 = vrot.slane %v864, 1
        %v866 = vadd.f32 %v864, %v865
        %867 = vst [vmem:[%s346] sm:$0x1] %v866
        %s868 = sand.u32 %s218, 1
        %s869 = scalar_lea.sflag [#allocation3], %s868
        %s870 = sand.u32 %s218, 1
        %s871 = scalar_lea.vmem [#allocation2], %s870
        // Predicated region
        $region53: #{tpu_custom_call.1} parent=51 // pred_check
          %p872 = pneg %p228
        $region54: #{tpu_custom_call.1} parent=51 // pred_check_branch
          %874 = sbr.rel (%p872) target = $region56
        $region55: #{tpu_custom_call.1} parent=51 // pred_region
          %s876 = ssub.s32 16, 16
          %877 = vsyncadd %s869, %s876
          %s878 = smul.addr %s22, 16
          %s879 = scalar_lea.hbm %s8, %s878
          %s881 = sshll.u32 %s871, 4
          %s882 = int_to_ptr.vmem [resolvable:$true] %s881
          %884 = dma.vmem_to_hbm [thread:$0]  %s882, 16, %s879, %s869
        $region56: #{tpu_custom_call.1} parent=51 // pred_fallthru
          _
      $region52: #{tpu_custom_call.1} parent=5 // pred_fallthru
        _
      %p885 = scmp.le.s32.totalorder 2, %s17
      // Predicated region
      $region57: #{tpu_custom_call.1} parent=5 // pred_check
        %p886 = pneg %p885
      $region58: #{tpu_custom_call.1} parent=5 // pred_check_branch
        %888 = sbr.rel (%p886) target = $region60
      $region59: #{tpu_custom_call.1} parent=5 // pred_region
        %s889 = ssub.s32 %s17, 2
        // Predicated region
        $region61: #{tpu_custom_call.1} parent=59 // pred_check
          %p890 = pneg %p234
        $region62: #{tpu_custom_call.1} parent=59 // pred_check_branch
          %892 = sbr.rel (%p890) target = $region64
        $region63: #{tpu_custom_call.1} parent=59 // pred_region
          %s893 = sand.u32 %s219, 1
          %s894 = scalar_lea.sflag [#allocation3], %s893
          %s895 = sand.u32 %s219, 1
          %s896 = scalar_lea.vmem [#allocation2], %s895
          %897 = dma.done %s894, 16
        $region64: #{tpu_custom_call.1} parent=59 // pred_fallthru
          _
      $region60: #{tpu_custom_call.1} parent=5 // pred_fallthru
        _
    $region6: #{tpu_custom_call.1} parent=1 // loop_footer
      %s21 = sadd.s32 1, %s17
    $region7: #{tpu_custom_call.1} parent=1 // loop_footer_branch
      %16 = sbr.rel target = $region3
    $region8: #{tpu_custom_call.1} parent=1 // loop_exit
      _
    %898 = vsyncpa [#allocation3], 1
    %s899 = scalar_lea.sflag [#allocation3], 1
    %900 = vsyncpa %s899, 1

// kernel: tpu_custom_call.1
$region0: #{tpu_custom_call.1}
  #allocation0 [shape = 'u32[]', space=smem, size = 0x4, offset = 0x4, fixed_abs, tag = 'smem constant byte address 0x4 - core index']
  #allocation1 [shape = 'u32[144,128]{1,0:T(1,128)}', space=vmem, size = 0x12000, scoped, tag = 'internal scratch']
  %s0 = inlined_call_operand.vmem [shape: f32[96,32], index: 0, kind: input, shape index: {}]
  %s1 = inlined_call_operand.vmem [shape: bf16[96,32], index: 1, kind: input, shape index: {}]
  %s2 = inlined_call_operand.vmem [shape: f32[96,128], index: 2, kind: input, shape index: {}]
  %s3 = inlined_call_operand.vmem [shape: f32[96,1], index: 3, kind: input, shape index: {}]
  %s4 = inlined_call_operand.vmem [shape: f32[32,128], index: 4, kind: input, shape index: {}]
  %s5 = inlined_call_operand.vmem [shape: bf16[32,128], index: 5, kind: input, shape index: {}]
  %s6 = inlined_call_operand.vmem [shape: bf16[128,32], index: 6, kind: input, shape index: {}]
  %s7 = inlined_call_operand.vmem [shape: f32[1,128], index: 7, kind: input, shape index: {}]
  %s8 = inlined_call_operand.hbm [shape: f32[3,1,128], index: 8, kind: output, shape index: {}]
  %s9 = sld [smem:[#allocation0]]
  $region65: #{tpu_custom_call.1} parent=0
    _
  %s11 = ssub.s32 1, %s9
  %s12 = scalar_select 0, %s11, %s9
  $region1: #{tpu_custom_call.1} parent=0
    #allocation2 [shape = 'u8[1024]{0}', space=vmem, size = 0x400, scoped, tag = 'output window, operand 0']
    #allocation3 [shape = 's32[2]{0}', space=sflag, size = 0x8, scoped, tag = 'scoped memory for tpu_custom_call.1']
    %13 = vsyncpa [#allocation3], 0
    %s14 = scalar_lea.sflag [#allocation3], 1
    %15 = vsyncpa %s14, 0
    loop: start=0, step=1, limit=5
    $region2: #{tpu_custom_call.1} parent=1 // loop_pre_header
      _
    $region3: #{tpu_custom_call.1} parent=1 // loop_header
      %s17 = sphi 0, %s21
      %p18 = scmp.ge.s32.totalorder %s17, 5
      %s27 = sphi 0, %s29
      %s30 = sphi 0, %s27
      %s31 = sphi 0, %s30
      %s47 = sphi 0, %s31
      %s53 = sphi 0, %s55
      %s56 = sphi 0, %s53
      %s57 = sphi 0, %s56
      %s73 = sphi 0, %s57
      %s79 = sphi 0, %s81
      %s82 = sphi 0, %s79
      %s83 = sphi 0, %s82
      %s99 = sphi 0, %s83
      %s105 = sphi 0, %s107
      %s108 = sphi 0, %s105
      %s109 = sphi 0, %s108
      %s125 = sphi 0, %s109
      %s129 = sphi 0, %s129
      %s131 = sphi 0, %s129
      %s132 = sphi 0, %s131
      %s146 = sphi 0, %s132
      %s150 = sphi 0, %s150
      %s152 = sphi 0, %s150
      %s153 = sphi 0, %s152
      %s167 = sphi 0, %s153
      %s171 = sphi 0, %s171
      %s173 = sphi 0, %s171
      %s174 = sphi 0, %s173
      %s188 = sphi 0, %s174
      %s192 = sphi 0, %s192
      %s194 = sphi 0, %s192
      %s195 = sphi 0, %s194
      %s209 = sphi 0, %s195
      %s215 = sphi 0, %s217
      %s218 = sphi 0, %s215
      %s219 = sphi 0, %s218
      %s235 = sphi 0, %s219
    $region4: #{tpu_custom_call.1} parent=1 // loop_header_branch
      %20 = sbr.rel (%p18) target = $region8
    $region5: #{tpu_custom_call.1} parent=1 // loop_body
      %s22 = ssub.s32 %s17, 1
      %s23 = ssub.s32 %s17, 2
      %s24 = sadd.s32 %s17, 1
      %s25 = ssub.s32 %s17, %s24
      %p26 = scmp.eq.s32.totalorder %s25, 0
      %s28 = sadd.s32 %s27, 1
      %s29 = scalar_select %p26, %s27, %s28
      %p32 = pneg %p26
      %p33 = scmp.eq.s32.totalorder %s17, 2
      %p34 = por %p32, %p33
      %p35 = scmp.ne.s32.totalorder %s27, %s30
      %p36 = scmp.eq.s32.totalorder %s17, 0
      %p37 = por %p35, %p36
      %p38 = scmp.ne.s32.totalorder %s27, %s30
      %p39 = scmp.eq.s32.totalorder %s22, 2
      %p40 = por %p38, %p39
      %p41 = scmp.ne.s32.totalorder %s30, %s31
      %p42 = scmp.eq.s32.totalorder %s22, 0
      %p43 = por %p41, %p42
      %p44 = scmp.ne.s32.totalorder %s30, %s31
      %p45 = scmp.eq.s32.totalorder %s23, 2
      %p46 = por %p44, %p45
      %p48 = scmp.ne.s32.totalorder %s31, %s47
      %p49 = scmp.eq.s32.totalorder %s23, 0
      %p50 = por %p48, %p49
      %s51 = ssub.s32 %s17, %s24
      %p52 = scmp.eq.s32.totalorder %s51, 0
      %s54 = sadd.s32 %s53, 1
      %s55 = scalar_select %p52, %s53, %s54
      %p58 = pneg %p52
      %p59 = scmp.eq.s32.totalorder %s17, 2
      %p60 = por %p58, %p59
      %p61 = scmp.ne.s32.totalorder %s53, %s56
      %p62 = scmp.eq.s32.totalorder %s17, 0
      %p63 = por %p61, %p62
      %p64 = scmp.ne.s32.totalorder %s53, %s56
      %p65 = scmp.eq.s32.totalorder %s22, 2
      %p66 = por %p64, %p65
      %p67 = scmp.ne.s32.totalorder %s56, %s57
      %p68 = scmp.eq.s32.totalorder %s22, 0
      %p69 = por %p67, %p68
      %p70 = scmp.ne.s32.totalorder %s56, %s57
      %p71 = scmp.eq.s32.totalorder %s23, 2
      %p72 = por %p70, %p71
      %p74 = scmp.ne.s32.totalorder %s57, %s73
      %p75 = scmp.eq.s32.totalorder %s23, 0
      %p76 = por %p74, %p75
      %s77 = ssub.s32 %s17, %s24
      %p78 = scmp.eq.s32.totalorder %s77, 0
      %s80 = sadd.s32 %s79, 1
      %s81 = scalar_select %p78, %s79, %s80
      %p84 = pneg %p78
      %p85 = scmp.eq.s32.totalorder %s17, 2
      %p86 = por %p84, %p85
      %p87 = scmp.ne.s32.totalorder %s79, %s82
      %p88 = scmp.eq.s32.totalorder %s17, 0
      %p89 = por %p87, %p88
      %p90 = scmp.ne.s32.totalorder %s79, %s82
      %p91 = scmp.eq.s32.totalorder %s22, 2
      %p92 = por %p90, %p91
      %p93 = scmp.ne.s32.totalorder %s82, %s83
      %p94 = scmp.eq.s32.totalorder %s22, 0
      %p95 = por %p93, %p94
      %p96 = scmp.ne.s32.totalorder %s82, %s83
      %p97 = scmp.eq.s32.totalorder %s23, 2
      %p98 = por %p96, %p97
      %p100 = scmp.ne.s32.totalorder %s83, %s99
      %p101 = scmp.eq.s32.totalorder %s23, 0
      %p102 = por %p100, %p101
      %s103 = ssub.s32 %s17, %s24
      %p104 = scmp.eq.s32.totalorder %s103, 0
      %s106 = sadd.s32 %s105, 1
      %s107 = scalar_select %p104, %s105, %s106
      %p110 = pneg %p104
      %p111 = scmp.eq.s32.totalorder %s17, 2
      %p112 = por %p110, %p111
      %p113 = scmp.ne.s32.totalorder %s105, %s108
      %p114 = scmp.eq.s32.totalorder %s17, 0
      %p115 = por %p113, %p114
      %p116 = scmp.ne.s32.totalorder %s105, %s108
      %p117 = scmp.eq.s32.totalorder %s22, 2
      %p118 = por %p116, %p117
      %p119 = scmp.ne.s32.totalorder %s108, %s109
      %p120 = scmp.eq.s32.totalorder %s22, 0
      %p121 = por %p119, %p120
      %p122 = scmp.ne.s32.totalorder %s108, %s109
      %p123 = scmp.eq.s32.totalorder %s23, 2
      %p124 = por %p122, %p123
      %p126 = scmp.ne.s32.totalorder %s109, %s125
      %p127 = scmp.eq.s32.totalorder %s23, 0
      %p128 = por %p126, %p127
      %s130 = sadd.s32 %s129, 1
      %p133 = scmp.eq.s32.totalorder %s17, 2
      %p134 = scmp.ne.s32.totalorder %s129, %s131
      %p135 = scmp.eq.s32.totalorder %s17, 0
      %p136 = por %p134, %p135
      %p137 = scmp.ne.s32.totalorder %s129, %s131
      %p138 = scmp.eq.s32.totalorder %s22, 2
      %p139 = por %p137, %p138
      %p140 = scmp.ne.s32.totalorder %s131, %s132
      %p141 = scmp.eq.s32.totalorder %s22, 0
      %p142 = por %p140, %p141
      %p143 = scmp.ne.s32.totalorder %s131, %s132
      %p144 = scmp.eq.s32.totalorder %s23, 2
      %p145 = por %p143, %p144
      %p147 = scmp.ne.s32.totalorder %s132, %s146
      %p148 = scmp.eq.s32.totalorder %s23, 0
      %p149 = por %p147, %p148
      %s151 = sadd.s32 %s150, 1
      %p154 = scmp.eq.s32.totalorder %s17, 2
      %p155 = scmp.ne.s32.totalorder %s150, %s152
      %p156 = scmp.eq.s32.totalorder %s17, 0
      %p157 = por %p155, %p156
      %p158 = scmp.ne.s32.totalorder %s150, %s152
      %p159 = scmp.eq.s32.totalorder %s22, 2
      %p160 = por %p158, %p159
      %p161 = scmp.ne.s32.totalorder %s152, %s153
      %p162 = scmp.eq.s32.totalorder %s22, 0
      %p163 = por %p161, %p162
      %p164 = scmp.ne.s32.totalorder %s152, %s153
      %p165 = scmp.eq.s32.totalorder %s23, 2
      %p166 = por %p164, %p165
      %p168 = scmp.ne.s32.totalorder %s153, %s167
      %p169 = scmp.eq.s32.totalorder %s23, 0
      %p170 = por %p168, %p169
      %s172 = sadd.s32 %s171, 1
      %p175 = scmp.eq.s32.totalorder %s17, 2
      %p176 = scmp.ne.s32.totalorder %s171, %s173
      %p177 = scmp.eq.s32.totalorder %s17, 0
      %p178 = por %p176, %p177
      %p179 = scmp.ne.s32.totalorder %s171, %s173
      %p180 = scmp.eq.s32.totalorder %s22, 2
      %p181 = por %p179, %p180
      %p182 = scmp.ne.s32.totalorder %s173, %s174
      %p183 = scmp.eq.s32.totalorder %s22, 0
      %p184 = por %p182, %p183
      %p185 = scmp.ne.s32.totalorder %s173, %s174
      %p186 = scmp.eq.s32.totalorder %s23, 2
      %p187 = por %p185, %p186
      %p189 = scmp.ne.s32.totalorder %s174, %s188
      %p190 = scmp.eq.s32.totalorder %s23, 0
      %p191 = por %p189, %p190
      %s193 = sadd.s32 %s192, 1
      %p196 = scmp.eq.s32.totalorder %s17, 2
      %p197 = scmp.ne.s32.totalorder %s192, %s194
      %p198 = scmp.eq.s32.totalorder %s17, 0
      %p199 = por %p197, %p198
      %p200 = scmp.ne.s32.totalorder %s192, %s194
      %p201 = scmp.eq.s32.totalorder %s22, 2
      %p202 = por %p200, %p201
      %p203 = scmp.ne.s32.totalorder %s194, %s195
      %p204 = scmp.eq.s32.totalorder %s22, 0
      %p205 = por %p203, %p204
      %p206 = scmp.ne.s32.totalorder %s194, %s195
      %p207 = scmp.eq.s32.totalorder %s23, 2
      %p208 = por %p206, %p207
      %p210 = scmp.ne.s32.totalorder %s195, %s209
      %p211 = scmp.eq.s32.totalorder %s23, 0
      %p212 = por %p210, %p211
      %s213 = ssub.s32 %s17, %s24
      %p214 = scmp.eq.s32.totalorder %s213, 0
      %s216 = sadd.s32 %s215, 1
      %s217 = scalar_select %p214, %s215, %s216
      %p220 = pneg %p214
      %p221 = scmp.eq.s32.totalorder %s17, 2
      %p222 = por %p220, %p221
      %p223 = scmp.ne.s32.totalorder %s215, %s218
      %p224 = scmp.eq.s32.totalorder %s17, 0
      %p225 = por %p223, %p224
      %p226 = scmp.ne.s32.totalorder %s215, %s218
      %p227 = scmp.eq.s32.totalorder %s22, 2
      %p228 = por %p226, %p227
      %p229 = scmp.ne.s32.totalorder %s218, %s219
      %p230 = scmp.eq.s32.totalorder %s22, 0
      %p231 = por %p229, %p230
      %p232 = scmp.ne.s32.totalorder %s218, %s219
      %p233 = scmp.eq.s32.totalorder %s23, 2
      %p234 = por %p232, %p233
      %p236 = scmp.ne.s32.totalorder %s219, %s235
      %p237 = scmp.eq.s32.totalorder %s23, 0
      %p238 = por %p236, %p237
      %p239 = scmp.le.s32.totalorder 1, %s17
      %p240 = scmp.lt.s32.totalorder %s17, 4
      %p241 = pnand %p239, %p240
      %p242 = pneg %p241
      // Predicated region
      $region9: #{tpu_custom_call.1} parent=5 // pred_check
        _
      $region10: #{tpu_custom_call.1} parent=5 // pred_check_branch
        %244 = sbr.rel (%p241) target = $region12
      $region11: #{tpu_custom_call.1} parent=5 // pred_region
        %s245 = ssub.s32 %s17, 1
        // Predicated region
        $region13: #{tpu_custom_call.1} parent=11 // pred_check
          %p246 = pneg %p142
        $region14: #{tpu_custom_call.1} parent=11 // pred_check_branch
          %248 = sbr.rel (%p246) target = $region16
        $region15: #{tpu_custom_call.1} parent=11 // pred_region
          _
        $region16: #{tpu_custom_call.1} parent=11 // pred_fallthru
          _
        // Predicated region
        $region17: #{tpu_custom_call.1} parent=11 // pred_check
          %p249 = pneg %p163
        $region18: #{tpu_custom_call.1} parent=11 // pred_check_branch
          %251 = sbr.rel (%p249) target = $region20
        $region19: #{tpu_custom_call.1} parent=11 // pred_region
          _
        $region20: #{tpu_custom_call.1} parent=11 // pred_fallthru
          _
        // Predicated region
        $region21: #{tpu_custom_call.1} parent=11 // pred_check
          %p252 = pneg %p184
        $region22: #{tpu_custom_call.1} parent=11 // pred_check_branch
          %254 = sbr.rel (%p252) target = $region24
        $region23: #{tpu_custom_call.1} parent=11 // pred_region
          _
        $region24: #{tpu_custom_call.1} parent=11 // pred_fallthru
          _
        // Predicated region
        $region25: #{tpu_custom_call.1} parent=11 // pred_check
          %p255 = pneg %p205
        $region26: #{tpu_custom_call.1} parent=11 // pred_check_branch
          %257 = sbr.rel (%p255) target = $region28
        $region27: #{tpu_custom_call.1} parent=11 // pred_region
          _
        $region28: #{tpu_custom_call.1} parent=11 // pred_fallthru
          _
      $region12: #{tpu_custom_call.1} parent=5 // pred_fallthru
        _
      %p258 = scmp.lt.s32.totalorder %s17, 3
      // Predicated region
      $region29: #{tpu_custom_call.1} parent=5 // pred_check
        %p259 = pneg %p258
      $region30: #{tpu_custom_call.1} parent=5 // pred_check_branch
        %261 = sbr.rel (%p259) target = $region32
      $region31: #{tpu_custom_call.1} parent=5 // pred_region
        // Predicated region
        $region33: #{tpu_custom_call.1} parent=31 // pred_check
          %p262 = pneg %p37
        $region34: #{tpu_custom_call.1} parent=31 // pred_check_branch
          %264 = sbr.rel (%p262) target = $region36
        $region35: #{tpu_custom_call.1} parent=31 // pred_region
          %s265 = smul.u32 4, %s17
          %p266 = scmp.lt.s32.totalorder %s265, 11
          %s267 = scalar_select %p266, %s265, 11
          %s268 = smul.addr %s267, 8
          %s269 = scalar_lea.vmem %s0, %s268
          %s270 = smul.u32 4, %s17
        $region36: #{tpu_custom_call.1} parent=31 // pred_fallthru
          _
        // Predicated region
        $region37: #{tpu_custom_call.1} parent=31 // pred_check
          %p271 = pneg %p63
        $region38: #{tpu_custom_call.1} parent=31 // pred_check_branch
          %273 = sbr.rel (%p271) target = $region40
        $region39: #{tpu_custom_call.1} parent=31 // pred_region
          %s274 = smul.u32 4, %s17
          %p275 = scmp.lt.s32.totalorder %s274, 11
          %s276 = scalar_select %p275, %s274, 11
          %s277 = smul.addr %s276, 4
          %s278 = scalar_lea.vmem %s1, %s277
          %s279 = smul.u32 4, %s17
        $region40: #{tpu_custom_call.1} parent=31 // pred_fallthru
          _
        // Predicated region
        $region41: #{tpu_custom_call.1} parent=31 // pred_check
          %p280 = pneg %p89
        $region42: #{tpu_custom_call.1} parent=31 // pred_check_branch
          %282 = sbr.rel (%p280) target = $region44
        $region43: #{tpu_custom_call.1} parent=31 // pred_region
          %s283 = smul.u32 4, %s17
          %p284 = scmp.lt.s32.totalorder %s283, 11
          %s285 = scalar_select %p284, %s283, 11
          %s286 = smul.addr %s285, 8
          %s287 = scalar_lea.vmem %s2, %s286
          %s288 = smul.u32 4, %s17
        $region44: #{tpu_custom_call.1} parent=31 // pred_fallthru
          _
        // Predicated region
        $region45: #{tpu_custom_call.1} parent=31 // pred_check
          %p289 = pneg %p115
        $region46: #{tpu_custom_call.1} parent=31 // pred_check_branch
          %291 = sbr.rel (%p289) target = $region48
        $region47: #{tpu_custom_call.1} parent=31 // pred_region
          %s292 = smul.u32 4, %s17
          %p293 = scmp.lt.s32.totalorder %s292, 11
          %s294 = scalar_select %p293, %s292, 11
          %s295 = smul.addr %s294, 8
          %s296 = scalar_lea.vmem %s3, %s295
          %s297 = smul.u32 4, %s17
        $region48: #{tpu_custom_call.1} parent=31 // pred_fallthru
          _
      $region32: #{tpu_custom_call.1} parent=5 // pred_fallthru
        _
      %p298 = scmp.le.s32.totalorder 1, %s17
      %p299 = scmp.lt.s32.totalorder %s17, 4
      %p300 = pnand %p298, %p299
      %p301 = pneg %p300
      // Predicated region
      $region49: #{tpu_custom_call.1} parent=5 // pred_check
        _
      $region50: #{tpu_custom_call.1} parent=5 // pred_check_branch
        %303 = sbr.rel (%p300) target = $region52
      $region51: #{tpu_custom_call.1} parent=5 // pred_region
        %s304 = ssub.s32 %s17, 1
        %s305 = smul.u32 4, %s22
        %p306 = scmp.lt.s32.totalorder %s305, 11
        %s307 = scalar_select %p306, %s305, 11
        %s308 = smul.addr %s307, 8
        %s309 = scalar_lea.vmem %s0, %s308
        %p310 = pneg %p43
        %p311 = pneg %p40
        %s312 = smul.u32 4, %s22
        %p313 = scmp.lt.s32.totalorder %s312, 11
        %s314 = scalar_select %p313, %s312, 11
        %s315 = smul.addr %s314, 4
        %s316 = scalar_lea.vmem %s1, %s315
        %p317 = pneg %p69
        %p318 = pneg %p66
        %s319 = smul.u32 4, %s22
        %p320 = scmp.lt.s32.totalorder %s319, 11
        %s321 = scalar_select %p320, %s319, 11
        %s322 = smul.addr %s321, 8
        %s323 = scalar_lea.vmem %s2, %s322
        %p324 = pneg %p95
        %p325 = pneg %p92
        %s326 = smul.u32 4, %s22
        %p327 = scmp.lt.s32.totalorder %s326, 11
        %s328 = scalar_select %p327, %s326, 11
        %s329 = smul.addr %s328, 8
        %s330 = scalar_lea.vmem %s3, %s329
        %p331 = pneg %p121
        %p332 = pneg %p118
        %p333 = pneg %p142
        %p334 = pneg %p139
        %p335 = pneg %p163
        %p336 = pneg %p160
        %p337 = pneg %p184
        %p338 = pneg %p181
        %p339 = pneg %p205
        %p340 = pneg %p202
        %p341 = pneg %p231
        %p342 = pneg %p228
        %s343 = sand.u32 %s218, 1
        %s344 = scalar_lea.sflag [#allocation3], %s343
        %s345 = sand.u32 %s218, 1
        %s346 = scalar_lea.vmem [#allocation2], %s345
        %s347 = smul.u32 4, %s22
        %p348 = scmp.lt.s32.totalorder %s347, 11
        %s349 = scalar_select %p348, %s347, 11
        %s350 = smul.addr %s349, 8
        %s351 = scalar_lea.vmem %s0, %s350
        %s352 = smul.u32 4, %s22
        %s353 = smul.u32 4, %s22
        %p354 = scmp.lt.s32.totalorder %s353, 11
        %s355 = scalar_select %p354, %s353, 11
        %s356 = smul.addr %s355, 4
        %s357 = scalar_lea.vmem %s1, %s356
        %s358 = smul.u32 4, %s22
        %s359 = smul.u32 4, %s22
        %p360 = scmp.lt.s32.totalorder %s359, 11
        %s361 = scalar_select %p360, %s359, 11
        %s362 = smul.addr %s361, 8
        %s363 = scalar_lea.vmem %s2, %s362
        %s364 = smul.u32 4, %s22
        %s365 = smul.u32 4, %s22
        %p366 = scmp.lt.s32.totalorder %s365, 11
        %s367 = scalar_select %p366, %s365, 11
        %s368 = smul.addr %s367, 8
        %s369 = scalar_lea.vmem %s3, %s368
        %s370 = smul.u32 4, %s22
        %v372 = vld [vmem:[%s369] sm:$0xff]
        %v373 = vld [vmem:[%s369 + $0x8] sm:$0xff]
        %v374 = vld [vmem:[%s369 + $0x10] sm:$0xff]
        %v375 = vld [vmem:[%s369 + $0x18] sm:$0xff]
        %v376 = vld [vmem:[%s351] sm:$0xff]
        %v377 = vld [vmem:[%s351 + $0x8] sm:$0xff]
        %v378 = vld [vmem:[%s351 + $0x10] sm:$0xff]
        %v379 = vld [vmem:[%s351 + $0x18] sm:$0xff]
        %381 = vset.pattern.permute.xlu0 0
        %382 = vperm.xlu0 %381, %v372
        %v383 = vpop.permute.xlu0 %382
        %386 = vset.pattern.permute.xlu0 0
        %387 = vperm.xlu0 %386, %v373
        %v388 = vpop.permute.xlu0 %387
        %391 = vset.pattern.permute.xlu0 0
        %392 = vperm.xlu0 %391, %v374
        %v393 = vpop.permute.xlu0 %392
        %396 = vset.pattern.permute.xlu0 0
        %397 = vperm.xlu0 %396, %v375
        %v398 = vpop.permute.xlu0 %397
        %v400 = vmul.f32 %v376, %v383
        %v401 = vmul.f32 %v377, %v388
        %v402 = vmul.f32 %v378, %v393
        %v403 = vmul.f32 %v379, %v398
        %v404 = vld [vmem:[%s363] sm:$0xff]
        %v405 = vld [vmem:[%s363 + $0x8] sm:$0xff]
        %v406 = vld [vmem:[%s363 + $0x10] sm:$0xff]
        %v407 = vld [vmem:[%s363 + $0x18] sm:$0xff]
        %v408 = vld [vmem:[%s4] sm:$0xff]
        %v409 = vld [vmem:[%s4 + $0x8] sm:$0xff]
        %v410 = vld [vmem:[%s4 + $0x10] sm:$0xff]
        %v411 = vld [vmem:[%s4 + $0x18] sm:$0xff]
        %v412 = vld [vmem:[%s5] sm:$0xf]
        %v413 = vld [vmem:[%s5 + $0x4] sm:$0xf]
        %v414 = vld [vmem:[%s5 + $0x8] sm:$0xf]
        %v415 = vld [vmem:[%s5 + $0xc] sm:$0xf]
        %v416 = vld [vmem:[%s6] sm:$0xf]
        %v417 = vld [vmem:[%s6 + $0x4] sm:$0xf]
        %v418 = vld [vmem:[%s6 + $0x8] sm:$0xf]
        %v419 = vld [vmem:[%s6 + $0xc] sm:$0xf]
        %v420 = vld [vmem:[%s6 + $0x10] sm:$0xf]
        %v421 = vld [vmem:[%s6 + $0x14] sm:$0xf]
        %v422 = vld [vmem:[%s6 + $0x18] sm:$0xf]
        %v423 = vld [vmem:[%s6 + $0x1c] sm:$0xf]
        %v424 = vld [vmem:[%s6 + $0x20] sm:$0xf]
        %v425 = vld [vmem:[%s6 + $0x24] sm:$0xf]
        %v426 = vld [vmem:[%s6 + $0x28] sm:$0xf]
        %v427 = vld [vmem:[%s6 + $0x2c] sm:$0xf]
        %v428 = vld [vmem:[%s6 + $0x30] sm:$0xf]
        %v429 = vld [vmem:[%s6 + $0x34] sm:$0xf]
        %v430 = vld [vmem:[%s6 + $0x38] sm:$0xf]
        %v431 = vld [vmem:[%s6 + $0x3c] sm:$0xf]
        %v432 = vld [vmem:[%s7] sm:$0x1]
        %v434 = vlaneseq
        %v435 = vshrl.u32 %v434, 7
        %v436 = vsub.s32 0, %v435
        %v437 = vrot.slane %v432, %v436
        %vm439 = vcmask 261120
        %v441 = vsel %vm439, %v400, 0
        %v444 = vsel %vm439, %v401, 0
        %v447 = vsel %vm439, %v402, 0
        %v450 = vsel %vm439, %v403, 0
        %452 = vmatprep.subr.mxu0 0.0
        %453 = vmatpush1.msra.mxu0 %v408
        %454 = vmatprep.subr.mxu0 0.0
        %455 = vmatpush1.msra.mxu0 %v409
        %456 = vmatprep.subr.mxu0 0.0
        %457 = vmatpush1.msra.mxu0 %v410
        %458 = vmatprep.subr.mxu0 0.0
        %459 = vmatpush1.msra.mxu0 %v411
        %460 = vmatprep.subr.mxu0 0.0
        %461 = vmatpush1.msra.mxu0 0.0
        %462 = vmatprep.subr.mxu0 0.0
        %463 = vmatpush1.msra.mxu0 0.0
        %464 = vmatprep.subr.mxu0 0.0
        %465 = vmatpush1.msra.mxu0 0.0
        %466 = vmatprep.subr.mxu0 0.0
        %467 = vmatpush1.msra.mxu0 0.0
        %468 = vmatprep.subr.mxu0 0.0
        %469 = vmatpush1.msra.mxu0 0.0
        %470 = vmatprep.subr.mxu0 0.0
        %471 = vmatpush1.msra.mxu0 0.0
        %472 = vmatprep.subr.mxu0 0.0
        %473 = vmatpush1.msra.mxu0 0.0
        %474 = vmatprep.subr.mxu0 0.0
        %475 = vmatpush1.msra.mxu0 0.0
        %476 = vmatprep.subr.mxu0 0.0
        %477 = vmatpush1.msra.mxu0 0.0
        %478 = vmatprep.subr.mxu0 0.0
        %479 = vmatpush1.msra.mxu0 0.0
        %480 = vmatprep.subr.mxu0 0.0
        %481 = vmatpush1.msra.mxu0 0.0
        %482 = vmatprep.subr.mxu0 0.0
        %483 = vmatpush1.msra.mxu0 0.0
        %484 = vmatprep.subr.mxu0 0.0
        %485 = vmatpush1.msra.mxu0 0.0
        %486 = vmatprep.subr.mxu0 0.0
        %487 = vmatpush1.msra.mxu0 0.0
        %488 = vmatprep.subr.mxu0 0.0
        %489 = vmatpush1.msra.mxu0 0.0
        %490 = vmatprep.subr.mxu0 0.0
        %491 = vmatpush1.msra.mxu0 0.0
        %492 = vmatprep.subr.mxu0 0.0
        %493 = vmatpush1.msra.mxu0 0.0
        %494 = vmatprep.subr.mxu0 0.0
        %495 = vmatpush1.msra.mxu0 0.0
        %496 = vmatprep.subr.mxu0 0.0
        %497 = vmatpush1.msra.mxu0 0.0
        %498 = vmatprep.subr.mxu0 0.0
        %499 = vmatpush1.msra.mxu0 0.0
        %500 = vmatprep.subr.mxu0 0.0
        %501 = vmatpush1.msra.mxu0 0.0
        %502 = vmatprep.subr.mxu0 0.0
        %503 = vmatpush1.msra.mxu0 0.0
        %504 = vmatprep.subr.mxu0 0.0
        %505 = vmatpush1.msra.mxu0 0.0
        %506 = vmatprep.subr.mxu0 0.0
        %507 = vmatpush1.msra.mxu0 0.0
        %508 = vmatprep.subr.mxu0 0.0
        %509 = vmatpush1.msra.mxu0 0.0
        %510 = vmatprep.subr.mxu0 0.0
        %511 = vmatpush1.msra.mxu0 0.0
        %512 = vmatprep.subr.mxu0 0.0
        %513 = vmatpush1.msra.mxu0 0.0
        %514 = vmatprep.subr.mxu0 0.0
        %515 = vmatpush1.msra.mxu0 0.0
        %516 = vmatprep.mubr.f32.mxu0 0.0
        %517 = vmatmul.mubr.f32.gmra.mrb[0].mxu0 %v441
        %v518 = vpop.f32.mrb[0].mxu0
        %v519 = vadd.f32 %v437, %v518
        %v520 = vpop.f32.mrb[0].mxu0
        %521 = vmatprep.mubr.f32.mxu0 0.0
        %522 = vmatmul.mubr.f32.gmra.mrb[0].mxu0 %v444
        %v523 = vpop.f32.mrb[0].mxu0
        %v524 = vadd.f32 %v437, %v523
        %v525 = vpop.f32.mrb[0].mxu0
        %526 = vmatprep.mubr.f32.mxu0 0.0
        %527 = vmatmul.mubr.f32.gmra.mrb[0].mxu0 %v447
        %v528 = vpop.f32.mrb[0].mxu0
        %v529 = vadd.f32 %v437, %v528
        %v530 = vpop.f32.mrb[0].mxu0
        %531 = vmatprep.mubr.f32.mxu0 0.0
        %532 = vmatmul.mubr.f32.gmra.mrb[0].mxu0 %v450
        %v533 = vpop.f32.mrb[0].mxu0
        %v534 = vadd.f32 %v437, %v533
        %v535 = vpop.f32.mrb[0].mxu0
        %536 = vdwg.mxu0
        %v537 = vsub.f32 %v519, %v404
        %v538 = vsub.f32 %v524, %v405
        %v539 = vsub.f32 %v529, %v406
        %v540 = vsub.f32 %v534, %v407
        %v541 = vld [vmem:[%s357] sm:$0xf]
        %v542 = vld [vmem:[%s357 + $0x4] sm:$0xf]
        %v543 = vld [vmem:[%s357 + $0x8] sm:$0xf]
        %v544 = vld [vmem:[%s357 + $0xc] sm:$0xf]
        %v545 = vunpack.c.l.bf16 %v541
        %v546 = vunpack.c.l.bf16 %v542
        %v547 = vunpack.c.l.bf16 %v543
        %v548 = vunpack.c.l.bf16 %v544
        %v549 = vmul.f32 %v372, 1e-05
        %v550 = vmul.f32 %v373, 1e-05
        %v551 = vmul.f32 %v374, 1e-05
        %v552 = vmul.f32 %v375, 1e-05
        %554 = vset.pattern.permute.xlu0 0
        %555 = vperm.xlu0 %554, %v549
        %v556 = vpop.permute.xlu0 %555
        %559 = vset.pattern.permute.xlu0 0
        %560 = vperm.xlu0 %559, %v550
        %v561 = vpop.permute.xlu0 %560
        %564 = vset.pattern.permute.xlu0 0
        %565 = vperm.xlu0 %564, %v551
        %v566 = vpop.permute.xlu0 %565
        %569 = vset.pattern.permute.xlu0 0
        %570 = vperm.xlu0 %569, %v552
        %v571 = vpop.permute.xlu0 %570
        %v573 = vmul.f32 %v545, %v556
        %v574 = vmul.f32 %v546, %v561
        %v575 = vmul.f32 %v547, %v566
        %v576 = vmul.f32 %v548, %v571
        %v577 = vpack.c.bf16 %v574, %v573
        %v578 = vpack.c.bf16 %v576, %v575
        %v583 = vunpack.c.l.b16 %v412
        %v584 = vunpack.c.l.b16 %v413
        %v585 = vunpack.c.l.b16 %v414
        %v586 = vunpack.c.l.b16 %v415
        %v587 = vpack.c.b16 %v584, %v583
        %v588 = vpack.c.b16 %v586, %v585
        %v592 = vsel %vm439, %v577, 0
        %v595 = vsel %vm439, %v578, 0
        %597 = vmatprep.subr.bf16.mxu0 0
        %598 = vmatpush1.bf16.msra.mxu0 %v587
        %599 = vmatprep.subr.bf16.mxu0 0
        %600 = vmatpush1.bf16.msra.mxu0 %v588
        %601 = vmatprep.subr.bf16.mxu0 0
        %602 = vmatpush1.bf16.msra.mxu0 0
        %603 = vmatprep.subr.bf16.mxu0 0
        %604 = vmatpush1.bf16.msra.mxu0 0
        %605 = vmatprep.subr.bf16.mxu0 0
        %606 = vmatpush1.bf16.msra.mxu0 0
        %607 = vmatprep.subr.bf16.mxu0 0
        %608 = vmatpush1.bf16.msra.mxu0 0
        %609 = vmatprep.subr.bf16.mxu0 0
        %610 = vmatpush1.bf16.msra.mxu0 0
        %611 = vmatprep.subr.bf16.mxu0 0
        %612 = vmatpush1.bf16.msra.mxu0 0
        %613 = vmatprep.subr.bf16.mxu0 0
        %614 = vmatpush1.bf16.msra.mxu0 0
        %615 = vmatprep.subr.bf16.mxu0 0
        %616 = vmatpush1.bf16.msra.mxu0 0
        %617 = vmatprep.subr.bf16.mxu0 0
        %618 = vmatpush1.bf16.msra.mxu0 0
        %619 = vmatprep.subr.bf16.mxu0 0
        %620 = vmatpush1.bf16.msra.mxu0 0
        %621 = vmatprep.subr.bf16.mxu0 0
        %622 = vmatpush1.bf16.msra.mxu0 0
        %623 = vmatprep.subr.bf16.mxu0 0
        %624 = vmatpush1.bf16.msra.mxu0 0
        %625 = vmatprep.subr.bf16.mxu0 0
        %626 = vmatpush1.bf16.msra.mxu0 0
        %627 = vmatprep.subr.bf16.mxu0 0
        %628 = vmatpush1.bf16.msra.mxu0 0
        %629 = vmatprep.mubr.bf16.mxu0 0
        %630 = vmatmul.mubr.bf16.gmra.mrb[0].mxu0 %v592
        %v631 = vpop.f32.mrb[0].mxu0
        %v632 = vadd.f32 0.0, %v631
        %v633 = vpop.f32.mrb[0].mxu0
        %v634 = vpop.f32.mrb[0].mxu0
        %v635 = vadd.f32 0.0, %v634
        %v636 = vpop.f32.mrb[0].mxu0
        %637 = vmatprep.mubr.bf16.mxu0 0
        %638 = vmatmul.mubr.bf16.gmra.mrb[0].mxu0 %v595
        %v639 = vpop.f32.mrb[0].mxu0
        %v640 = vadd.f32 0.0, %v639
        %v641 = vpop.f32.mrb[0].mxu0
        %v642 = vpop.f32.mrb[0].mxu0
        %v643 = vadd.f32 0.0, %v642
        %v644 = vpop.f32.mrb[0].mxu0
        %645 = vdwg.mxu0
        %v646 = vadd.f32 %v537, %v632
        %v647 = vadd.f32 %v538, %v635
        %v648 = vadd.f32 %v539, %v640
        %v649 = vadd.f32 %v540, %v643
        %v650 = vpack.c.bf16 %v647, %v646
        %v651 = vpack.c.bf16 %v649, %v648
        %v668 = vunpack.c.l.b16 %v416
        %v669 = vunpack.c.l.b16 %v417
        %v670 = vunpack.c.l.b16 %v418
        %v671 = vunpack.c.l.b16 %v419
        %v672 = vunpack.c.l.b16 %v420
        %v673 = vunpack.c.l.b16 %v421
        %v674 = vunpack.c.l.b16 %v422
        %v675 = vunpack.c.l.b16 %v423
        %v676 = vunpack.c.l.b16 %v424
        %v677 = vunpack.c.l.b16 %v425
        %v678 = vunpack.c.l.b16 %v426
        %v679 = vunpack.c.l.b16 %v427
        %v680 = vunpack.c.l.b16 %v428
        %v681 = vunpack.c.l.b16 %v429
        %v682 = vunpack.c.l.b16 %v430
        %v683 = vunpack.c.l.b16 %v431
        %v684 = vpack.c.b16 %v669, %v668
        %v685 = vpack.c.b16 %v671, %v670
        %v686 = vpack.c.b16 %v673, %v672
        %v687 = vpack.c.b16 %v675, %v674
        %v688 = vpack.c.b16 %v677, %v676
        %v689 = vpack.c.b16 %v679, %v678
        %v690 = vpack.c.b16 %v681, %v680
        %v691 = vpack.c.b16 %v683, %v682
        %700 = vmatprep.subr.bf16.mxu0 0
        %701 = vmatpush1.bf16.msra.mxu0 %v684
        %702 = vmatprep.subr.bf16.mxu0 0
        %703 = vmatpush1.bf16.msra.mxu0 %v685
        %704 = vmatprep.subr.bf16.mxu0 0
        %705 = vmatpush1.bf16.msra.mxu0 %v686
        %706 = vmatprep.subr.bf16.mxu0 0
        %707 = vmatpush1.bf16.msra.mxu0 %v687
        %708 = vmatprep.subr.bf16.mxu0 0
        %709 = vmatpush1.bf16.msra.mxu0 %v688
        %710 = vmatprep.subr.bf16.mxu0 0
        %711 = vmatpush1.bf16.msra.mxu0 %v689
        %712 = vmatprep.subr.bf16.mxu0 0
        %713 = vmatpush1.bf16.msra.mxu0 %v690
        %714 = vmatprep.subr.bf16.mxu0 0
        %715 = vmatpush1.bf16.msra.mxu0 %v691
        %716 = vmatprep.subr.bf16.mxu0 0
        %717 = vmatpush1.bf16.msra.mxu0 0
        %718 = vmatprep.subr.bf16.mxu0 0
        %719 = vmatpush1.bf16.msra.mxu0 0
        %720 = vmatprep.subr.bf16.mxu0 0
        %721 = vmatpush1.bf16.msra.mxu0 0
        %722 = vmatprep.subr.bf16.mxu0 0
        %723 = vmatpush1.bf16.msra.mxu0 0
        %724 = vmatprep.subr.bf16.mxu0 0
        %725 = vmatpush1.bf16.msra.mxu0 0
        %726 = vmatprep.subr.bf16.mxu0 0
        %727 = vmatpush1.bf16.msra.mxu0 0
        %728 = vmatprep.subr.bf16.mxu0 0
        %729 = vmatpush1.bf16.msra.mxu0 0
        %730 = vmatprep.subr.bf16.mxu0 0
        %731 = vmatpush1.bf16.msra.mxu0 0
        %732 = vmatprep.mubr.bf16.mxu0 0
        %733 = vmatmul.mubr.bf16.gmra.mrb[0].mxu0 %v650
        %v734 = vpop.f32.mrb[0].mxu0
        %v735 = vadd.f32 0.0, %v734
        %v736 = vpop.f32.mrb[0].mxu0
        %v737 = vpop.f32.mrb[0].mxu0
        %v738 = vadd.f32 0.0, %v737
        %v739 = vpop.f32.mrb[0].mxu0
        %740 = vmatprep.mubr.bf16.mxu0 0
        %741 = vmatmul.mubr.bf16.gmra.mrb[0].mxu0 %v651
        %v742 = vpop.f32.mrb[0].mxu0
        %v743 = vadd.f32 0.0, %v742
        %v744 = vpop.f32.mrb[0].mxu0
        %v745 = vpop.f32.mrb[0].mxu0
        %v746 = vadd.f32 0.0, %v745
        %v747 = vpop.f32.mrb[0].mxu0
        %748 = vdwg.mxu0
        %v749 = vmul.f32 %v735, 0.003125
        %v750 = vmul.f32 %v738, 0.003125
        %v751 = vmul.f32 %v743, 0.003125
        %v752 = vmul.f32 %v746, 0.003125
        %v753 = vmul.f32 %v749, %v383
        %v754 = vmul.f32 %v750, %v388
        %v755 = vmul.f32 %v751, %v393
        %v756 = vmul.f32 %v752, %v398
        %v757 = vmul.f32 %v753, 0.001
        %v758 = vmul.f32 %v754, 0.001
        %v759 = vmul.f32 %v755, 0.001
        %v760 = vmul.f32 %v756, 0.001
        %v761 = vadd.f32 %v573, %v757
        %v762 = vadd.f32 %v574, %v758
        %v763 = vadd.f32 %v575, %v759
        %v764 = vadd.f32 %v576, %v760
        %v765 = vand.u32 2147483647, %v761
        %v766 = vand.u32 2147483647, %v762
        %v767 = vand.u32 2147483647, %v763
        %v768 = vand.u32 2147483647, %v764
        %v769 = vsel %vm439, %v765, -inf
        %770 = vmax.xlane.f32.xlu0 %v769
        %v771 = vpop.xlane.xlu0 %770
        %v772 = vsel %vm439, %v766, -inf
        %773 = vmax.xlane.f32.xlu0 %v772
        %v774 = vpop.xlane.xlu0 %773
        %v775 = vsel %vm439, %v767, -inf
        %776 = vmax.xlane.f32.xlu0 %v775
        %v777 = vpop.xlane.xlu0 %776
        %v778 = vsel %vm439, %v768, -inf
        %779 = vmax.xlane.f32.xlu0 %v778
        %v780 = vpop.xlane.xlu0 %779
        %v781 = vadd.f32 %v771, 1e-06
        %v782 = vadd.f32 %v774, 1e-06
        %v783 = vadd.f32 %v777, 1e-06
        %v784 = vadd.f32 %v780, 1e-06
        %v785 = vrcp.pop %v781
        %v786 = vmul.f32 %v761, %v785
        %v787 = vrcp.pop %v782
        %v788 = vmul.f32 %v762, %v787
        %v789 = vrcp.pop %v783
        %v790 = vmul.f32 %v763, %v789
        %v791 = vrcp.pop %v784
        %v792 = vmul.f32 %v764, %v791
        %v793 = vpack.c.bf16 %v788, %v786
        %v794 = vpack.c.bf16 %v792, %v790
        %v796 = vsel %vm439, %v793, 0
        %v799 = vsel %vm439, %v794, 0
        %801 = vmatprep.subr.bf16.mxu0 0
        %802 = vmatpush1.bf16.msra.mxu0 %v587
        %803 = vmatprep.subr.bf16.mxu0 0
        %804 = vmatpush1.bf16.msra.mxu0 %v588
        %805 = vmatprep.subr.bf16.mxu0 0
        %806 = vmatpush1.bf16.msra.mxu0 0
        %807 = vmatprep.subr.bf16.mxu0 0
        %808 = vmatpush1.bf16.msra.mxu0 0
        %809 = vmatprep.subr.bf16.mxu0 0
        %810 = vmatpush1.bf16.msra.mxu0 0
        %811 = vmatprep.subr.bf16.mxu0 0
        %812 = vmatpush1.bf16.msra.mxu0 0
        %813 = vmatprep.subr.bf16.mxu0 0
        %814 = vmatpush1.bf16.msra.mxu0 0
        %815 = vmatprep.subr.bf16.mxu0 0
        %816 = vmatpush1.bf16.msra.mxu0 0
        %817 = vmatprep.subr.bf16.mxu0 0
        %818 = vmatpush1.bf16.msra.mxu0 0
        %819 = vmatprep.subr.bf16.mxu0 0
        %820 = vmatpush1.bf16.msra.mxu0 0
        %821 = vmatprep.subr.bf16.mxu0 0
        %822 = vmatpush1.bf16.msra.mxu0 0
        %823 = vmatprep.subr.bf16.mxu0 0
        %824 = vmatpush1.bf16.msra.mxu0 0
        %825 = vmatprep.subr.bf16.mxu0 0
        %826 = vmatpush1.bf16.msra.mxu0 0
        %827 = vmatprep.subr.bf16.mxu0 0
        %828 = vmatpush1.bf16.msra.mxu0 0
        %829 = vmatprep.subr.bf16.mxu0 0
        %830 = vmatpush1.bf16.msra.mxu0 0
        %831 = vmatprep.subr.bf16.mxu0 0
        %832 = vmatpush1.bf16.msra.mxu0 0
        %833 = vmatprep.mubr.bf16.mxu0 0
        %834 = vmatmul.mubr.bf16.gmra.mrb[0].mxu0 %v796
        %v835 = vpop.f32.mrb[0].mxu0
        %v836 = vadd.f32 0.0, %v835
        %v837 = vpop.f32.mrb[0].mxu0
        %v838 = vpop.f32.mrb[0].mxu0
        %v839 = vadd.f32 0.0, %v838
        %v840 = vpop.f32.mrb[0].mxu0
        %841 = vmatprep.mubr.bf16.mxu0 0
        %842 = vmatmul.mubr.bf16.gmra.mrb[0].mxu0 %v799
        %v843 = vpop.f32.mrb[0].mxu0
        %v844 = vadd.f32 0.0, %v843
        %v845 = vpop.f32.mrb[0].mxu0
        %v846 = vpop.f32.mrb[0].mxu0
        %v847 = vadd.f32 0.0, %v846
        %v848 = vpop.f32.mrb[0].mxu0
        %849 = vdwg.mxu0
        %v850 = vadd.f32 %v537, %v836
        %v851 = vadd.f32 %v538, %v839
        %v852 = vadd.f32 %v539, %v844
        %v853 = vadd.f32 %v540, %v847
        %v854 = vmul.f32 %v850, %v850
        %v855 = vmul.f32 %v851, %v851
        %v856 = vmul.f32 %v852, %v852
        %v857 = vmul.f32 %v853, %v853
        %v858 = vadd.f32 %v854, %v855
        %v859 = vadd.f32 %v858, %v856
        %v860 = vadd.f32 %v859, %v857
        %v861 = vrot.slane %v860, 4
        %v862 = vadd.f32 %v860, %v861
        %v863 = vrot.slane %v862, 2
        %v864 = vadd.f32 %v862, %v863
        %v865 = vrot.slane %v864, 1
        %v866 = vadd.f32 %v864, %v865
        %867 = vst [vmem:[%s346] sm:$0x1] %v866
        %s868 = sand.u32 %s218, 1
        %s869 = scalar_lea.sflag [#allocation3], %s868
        %s870 = sand.u32 %s218, 1
        %s871 = scalar_lea.vmem [#allocation2], %s870
        // Predicated region
        $region53: #{tpu_custom_call.1} parent=51 // pred_check
          %p872 = pneg %p228
        $region54: #{tpu_custom_call.1} parent=51 // pred_check_branch
          %874 = sbr.rel (%p872) target = $region56
        $region55: #{tpu_custom_call.1} parent=51 // pred_region
          %s876 = ssub.s32 16, 16
          %877 = vsyncadd %s869, %s876
          %s878 = smul.addr %s22, 16
          %s879 = scalar_lea.hbm %s8, %s878
          %s881 = sshll.u32 %s871, 4
          %s882 = int_to_ptr.vmem [resolvable:$true] %s881
          %884 = dma.vmem_to_hbm [thread:$0]  %s882, 16, %s879, %s869
        $region56: #{tpu_custom_call.1} parent=51 // pred_fallthru
          _
      $region52: #{tpu_custom_call.1} parent=5 // pred_fallthru
        _
      %p885 = scmp.le.s32.totalorder 2, %s17
      // Predicated region
      $region57: #{tpu_custom_call.1} parent=5 // pred_check
        %p886 = pneg %p885
      $region58: #{tpu_custom_call.1} parent=5 // pred_check_branch
        %888 = sbr.rel (%p886) target = $region60
      $region59: #{tpu_custom_call.1} parent=5 // pred_region
        %s889 = ssub.s32 %s17, 2
        // Predicated region
        $region61: #{tpu_custom_call.1} parent=59 // pred_check
          %p890 = pneg %p234
        $region62: #{tpu_custom_call.1} parent=59 // pred_check_branch
          %892 = sbr.rel (%p890) target = $region64
        $region63: #{tpu_custom_call.1} parent=59 // pred_region
          %s893 = sand.u32 %s219, 1
          %s894 = scalar_lea.sflag [#allocation3], %s893
          %s895 = sand.u32 %s219, 1
          %s896 = scalar_lea.vmem [#allocation2], %s895
          %897 = dma.done %s894, 16
        $region64: #{tpu_custom_call.1} parent=59 // pred_fallthru
          _
      $region60: #{tpu_custom_call.1} parent=5 // pred_fallthru
        _
    $region6: #{tpu_custom_call.1} parent=1 // loop_footer
      %s21 = sadd.s32 1, %s17
    $region7: #{tpu_custom_call.1} parent=1 // loop_footer_branch
      %16 = sbr.rel target = $region3
    $region8: #{tpu_custom_call.1} parent=1 // loop_exit
      _
    %898 = vsyncpa [#allocation3], 1
    %s899 = scalar_lea.sflag [#allocation3], 1
    %900 = vsyncpa %s899, 1

</llo_original>
